<compile_context>
chip_gen: v7x
topology: tpu7x:2x2x1
jax: 0.10.0
libtpu: 0.0.40
codegen_flags: <defaults>
</compile_context>

<pallas_src>
import jax
import jax.numpy as jnp
from jax.experimental import pallas as pl
from jax.experimental.pallas import tpu as pltpu


DIM = 128              # hidden dim of the GIN MLPs / BN / fc1_xd output
NUM_FEATURES_XD = 128
OUTPUT_DIM = 128
N_OUTPUT = 1
NUM_LAYERS = 5

TILE = 256             # row tile == K tile for the A_hat @ h contraction
TILE_M = TILE
TILE_K = TILE

VMEM_LIMIT = 32 * 1024 * 1024   # explicit scoped-VMEM budget (portable v5e/v6e/v7x)


# ---------------------------------------------------------------------------
# Kernel 1: all 5 GIN layers, fused.  Grid = (layer, row_tile, k_tile).
#   agg  = A_hat @ h_prev          (accumulated over k tiles, fp32 scratch)
#   h1   = relu(agg @ W1 + b1)
#   h2   = h1 @ W2 + b2            (GINConv MLP output)
#   y    = relu(h2) * bn_scale + bn_shift
# h_prev lives in a ping-pong VMEM scratch (flattened 2*N_pad rows, bf16).
# ---------------------------------------------------------------------------
def fused_gin_kernel(a_ref, x_ref, w1_ref, b1_ref, w2_ref, b2_ref,
                     scale_ref, shift_ref, o_ref, acc_ref, act_ref):
    l = pl.program_id(0)
    i = pl.program_id(1)
    k = pl.program_id(2)
    nk = pl.num_programs(2)

    half = act_ref.shape[0] // 2          # = n_pad (static)
    cur = (l % 2) * half                  # row base of this layer's input
    nxt = ((l + 1) % 2) * half            # row base of this layer's output

    # Stage the layer-0 input (x) into the ping-pong scratch the first time
    # each K slice is needed (l == 0, first row tile).
    @pl.when(jnp.logical_and(l == 0, i == 0))
    def _():
        act_ref[pl.ds(pl.multiple_of(k * TILE_K, TILE_K), TILE_K), :] = x_ref[...]

    # Zero the aggregation accumulator at the start of the K reduction.
    @pl.when(k == 0)
    def _():
        acc_ref[...] = jnp.zeros_like(acc_ref)

    # Aggregation: A_hat tile (TILE_M, TILE_K) @ h_prev slice (TILE_K, DIM).
    # TODO(synk): for very sparse / very large graphs replace this dense tiled
    # matmul with CSR gather + segment-sum (or block-skip zero A_hat tiles).
    h_k = act_ref[pl.ds(pl.multiple_of(cur + k * TILE_K, TILE_K), TILE_K), :]
    acc_ref[...] += jnp.dot(a_ref[...], h_k, preferred_element_type=jnp.float32)

    # After the last K tile: run the GIN MLP + ReLU + folded BatchNorm.
    @pl.when(k == nk - 1)
    def _():
        agg = acc_ref[...]
        h1 = jnp.dot(agg.astype(jnp.bfloat16), w1_ref[...],
                     preferred_element_type=jnp.float32) + b1_ref[...]
        h1 = jnp.maximum(h1, 0.0)
        h2 = jnp.dot(h1.astype(jnp.bfloat16), w2_ref[...],
                     preferred_element_type=jnp.float32) + b2_ref[...]
        y = jnp.maximum(h2, 0.0) * scale_ref[...] + shift_ref[...]
        # Keep activations VMEM-resident for the next layer (bf16 MXU input).
        act_ref[pl.ds(pl.multiple_of(nxt + i * TILE_M, TILE_M), TILE_M), :] = (
            y.astype(jnp.bfloat16))
        # Output block: last layer's write is the one that survives in HBM.
        o_ref[...] = y.astype(o_ref.dtype)


def fused_gin_layers(a_hat, x, w1s, b1s, w2s, b2s, scales, shifts):
    n_pad = x.shape[0]
    m_tiles = n_pad // TILE_M
    k_tiles = n_pad // TILE_K
    grid = (NUM_LAYERS, m_tiles, k_tiles)

    flops = NUM_LAYERS * (2 * n_pad * n_pad * DIM + 4 * n_pad * DIM * DIM)
    bytes_accessed = (NUM_LAYERS * n_pad * n_pad * 2    # A_hat streamed per layer (bf16)
                      + n_pad * DIM * 2                 # x
                      + NUM_LAYERS * 2 * DIM * DIM * 2  # W1/W2 (bf16)
                      + NUM_LAYERS * 4 * DIM * 4        # biases + BN scale/shift
                      + n_pad * DIM * 4)                # output

    layer_w = pl.BlockSpec((None, DIM, DIM), lambda l, i, k: (l, 0, 0))
    layer_v = pl.BlockSpec((None, 1, DIM), lambda l, i, k: (l, 0, 0))

    return pl.pallas_call(
        fused_gin_kernel,
        out_shape=jax.ShapeDtypeStruct((n_pad, DIM), jnp.float32),
        grid_spec=pltpu.PrefetchScalarGridSpec(
            num_scalar_prefetch=0,
            grid=grid,
            in_specs=[
                pl.BlockSpec((TILE_M, TILE_K), lambda l, i, k: (i, k)),   # A_hat
                pl.BlockSpec((TILE_K, DIM), lambda l, i, k: (k, 0)),      # x (layer 0)
                layer_w,  # W1 stack
                layer_v,  # b1 stack
                layer_w,  # W2 stack
                layer_v,  # b2 stack
                layer_v,  # BN scale
                layer_v,  # BN shift
            ],
            out_specs=pl.BlockSpec((TILE_M, DIM), lambda l, i, k: (i, 0)),
            scratch_shapes=[
                pltpu.VMEM((TILE_M, DIM), jnp.float32),          # aggregation acc
                pltpu.VMEM((2 * n_pad, DIM), jnp.bfloat16),      # ping-pong activations
            ],
        ),
        compiler_params=pltpu.CompilerParams(
            dimension_semantics=("arbitrary", "arbitrary", "arbitrary"),
            vmem_limit_bytes=VMEM_LIMIT,
        ),
        cost_estimate=pl.CostEstimate(flops=flops, transcendentals=0,
                                      bytes_accessed=bytes_accessed),
    )(a_hat, x, w1s, b1s, w2s, b2s, scales, shifts)


# ---------------------------------------------------------------------------
# Kernel 2: pooling + prediction head (lane-dense output).
#   pooled = P @ h                       (global_add_pool)
#   f  = relu(pooled @ W_xd + b_xd)      (fc1_xd; dropout = identity in eval)
#   f  = relu(f @ W_fc1 + b_fc1)
#   f  = relu(f @ W_fc2 + b_fc2)         -> (G_pad, 256) lane-dense output
# Final 256 -> 1 projection + bias runs in plain JAX (avoids a last-dim-1
# masked-store output from the kernel).
# ---------------------------------------------------------------------------
def head_kernel(p_ref, h_ref, wxd_ref, bxd_ref, w1_ref, b1_ref,
                w2_ref, b2_ref, o_ref):
    pooled = jnp.dot(p_ref[...], h_ref[...], preferred_element_type=jnp.float32)
    f = jnp.maximum(
        jnp.dot(pooled.astype(jnp.bfloat16), wxd_ref[...],
                preferred_element_type=jnp.float32) + bxd_ref[...], 0.0)
    # TODO(synk): dropout layers are identity here (inference mode).
    f = jnp.maximum(
        jnp.dot(f.astype(jnp.bfloat16), w1_ref[...],
                preferred_element_type=jnp.float32) + b1_ref[...], 0.0)
    f = jnp.maximum(
        jnp.dot(f.astype(jnp.bfloat16), w2_ref[...],
                preferred_element_type=jnp.float32) + b2_ref[...], 0.0)
    o_ref[...] = f.astype(o_ref.dtype)


def head(pool_mat, h, params):
    g_pad, n_pad = pool_mat.shape
    vmem = pl.BlockSpec(memory_space=pltpu.MemorySpace.VMEM)

    flops = 2 * g_pad * (n_pad * DIM + DIM * OUTPUT_DIM
                         + OUTPUT_DIM * 1024 + 1024 * 256)
    bytes_accessed = (g_pad * n_pad * 2 + n_pad * DIM * 2
                      + (DIM * OUTPUT_DIM + OUTPUT_DIM * 1024 + 1024 * 256) * 2
                      + (OUTPUT_DIM + 1024 + 256) * 4
                      + g_pad * 256 * 4)

    return pl.pallas_call(
        head_kernel,
        out_shape=jax.ShapeDtypeStruct((g_pad, 256), jnp.float32),
        in_specs=[vmem] * 8,
        out_specs=vmem,
        compiler_params=pltpu.CompilerParams(vmem_limit_bytes=VMEM_LIMIT),
        cost_estimate=pl.CostEstimate(flops=flops, transcendentals=0,
                                      bytes_accessed=bytes_accessed),
    )(pool_mat, h,
      params["wxd"], params["bxd"],
      params["wfc1"], params["bfc1"],
      params["wfc2"], params["bfc2"])


# ---------------------------------------------------------------------------
# Parameter construction (deterministic, synthetic).
# ---------------------------------------------------------------------------
def make_params(key):
    keys = jax.random.split(key, 64)      # 48 keys consumed; headroom to spare
    ki = iter(keys)

    def linear(fan_in, fan_out, w_dtype=jnp.float32):
        w = (jax.random.normal(next(ki), (fan_in, fan_out), jnp.float32)
             * (1.0 / jnp.sqrt(fan_in)))
        b = jax.random.normal(next(ki), (1, fan_out), jnp.float32) * 0.01
        return w.astype(w_dtype), b

    w1s, b1s, w2s, b2s, scales, shifts = [], [], [], [], [], []
    in_dim = NUM_FEATURES_XD
    for _ in range(NUM_LAYERS):
        w1, b1 = linear(in_dim, DIM, jnp.bfloat16)
        w2, b2 = linear(DIM, DIM, jnp.bfloat16)
        # BatchNorm1d (eval): fold gamma, beta, running_mean, running_var
        # into per-channel scale/shift.
        gamma = 1.0 + 0.1 * jax.random.normal(next(ki), (1, DIM), jnp.float32)
        beta = 0.1 * jax.random.normal(next(ki), (1, DIM), jnp.float32)
        rmean = 0.1 * jax.random.normal(next(ki), (1, DIM), jnp.float32)
        rvar = jnp.abs(jax.random.normal(next(ki), (1, DIM), jnp.float32)) + 0.5
        scale = gamma / jnp.sqrt(rvar + 1e-5)
        shift = beta - rmean * scale
        w1s.append(w1); b1s.append(b1); w2s.append(w2); b2s.append(b2)
        scales.append(scale); shifts.append(shift)
        in_dim = DIM

    params = {
        "w1s": jnp.stack(w1s), "b1s": jnp.stack(b1s),
        "w2s": jnp.stack(w2s), "b2s": jnp.stack(b2s),
        "scales": jnp.stack(scales), "shifts": jnp.stack(shifts),
    }
    params["wxd"], params["bxd"] = linear(DIM, OUTPUT_DIM, jnp.bfloat16)
    params["wfc1"], params["bfc1"] = linear(OUTPUT_DIM, 1024, jnp.bfloat16)
    params["wfc2"], params["bfc2"] = linear(1024, 256, jnp.bfloat16)
    params["wout"], params["bout"] = linear(256, N_OUTPUT, jnp.float32)
    return params


# ---------------------------------------------------------------------------
# Full forward pass (glue in plain JAX, hot path in the two Pallas kernels).
# ---------------------------------------------------------------------------
def gin_conv_net_forward(x, edge_index, batch, num_graphs, params, eps=0.0):
    n = x.shape[0]
    n_pad = ((n + TILE - 1) // TILE) * TILE

    # Dense A_hat = A + (1+eps)*I over the padded node set; padded rows/cols
    # stay exactly zero so they never contaminate real nodes.  Duplicate
    # edges are summed (matches PyG GINConv sum aggregation).
    src, dst = edge_index[0], edge_index[1]
    adj = jnp.zeros((n_pad, n_pad), jnp.float32).at[dst, src].add(1.0)
    diag = jnp.where(jnp.arange(n_pad) < n, 1.0 + eps, 0.0)
    a_hat = (adj + jnp.diag(diag)).astype(jnp.bfloat16)

    x_pad = (jnp.zeros((n_pad, NUM_FEATURES_XD), jnp.float32)
             .at[:n, :].set(x).astype(jnp.bfloat16))

    h = fused_gin_layers(a_hat, x_pad,
                         params["w1s"], params["b1s"],
                         params["w2s"], params["b2s"],
                         params["scales"], params["shifts"])   # (n_pad, DIM) fp32

    # Pooling matrix P[g, n] = 1 iff batch[n] == g; padded nodes get batch -1.
    g_pad = ((max(num_graphs, 8) + 7) // 8) * 8
    batch_pad = jnp.full((n_pad,), -1, jnp.int32).at[:n].set(batch)
    pool_mat = (batch_pad[None, :] ==
                jnp.arange(g_pad, dtype=jnp.int32)[:, None]).astype(jnp.bfloat16)

    feats = head(pool_mat, h.astype(jnp.bfloat16), params)     # (g_pad, 256) fp32
    out = jnp.dot(feats[:num_graphs], params["wout"]) + params["bout"]
    return out


if __name__ == "__main__":
    key = jax.random.PRNGKey(0)
    k_param, k_x, k_edge = jax.random.split(key, 3)

    num_nodes = 300       # pads to 512 -> exercises a 2x2 (row, K) tile grid
    num_graphs = 2
    num_edges = 900

    params = make_params(k_param)

    x = jax.random.normal(k_x, (num_nodes, NUM_FEATURES_XD), jnp.float32)
    # Random directed edges within the real node set, deterministic.
    edge_index = jax.random.randint(k_edge, (2, num_edges), 0, num_nodes, jnp.int32)
    # First half of the nodes belong to graph 0, second half to graph 1.
    batch = jnp.concatenate([jnp.zeros(num_nodes // 2, jnp.int32),
                             jnp.ones(num_nodes - num_nodes // 2, jnp.int32)])

    out = gin_conv_net_forward(x, edge_index, batch, num_graphs, params)
    out = jax.block_until_ready(out)

    assert out.shape == (num_graphs, N_OUTPUT)
    assert bool(jnp.all(jnp.isfinite(out)))
    print("KERNEL_OK")
</pallas_src>

<mosaic_0001>
module attributes {stable_mosaic.version = 11 : i64} {
  func.func @fused_gin_kernel(%arg0: i32, %arg1: i32, %arg2: i32, %arg3: memref<256x256xbf16, #tpu.memory_space<vmem>>, %arg4: memref<256x128xbf16, #tpu.memory_space<vmem>>, %arg5: memref<1x128x128xbf16, #tpu.memory_space<vmem>>, %arg6: memref<1x1x128xf32, #tpu.memory_space<vmem>>, %arg7: memref<1x128x128xbf16, #tpu.memory_space<vmem>>, %arg8: memref<1x1x128xf32, #tpu.memory_space<vmem>>, %arg9: memref<1x1x128xf32, #tpu.memory_space<vmem>>, %arg10: memref<1x1x128xf32, #tpu.memory_space<vmem>>, %arg11: memref<256x128xf32, #tpu.memory_space<vmem>>, %arg12: memref<256x128xf32, #tpu.memory_space<vmem>>, %arg13: memref<1024x128xbf16, #tpu.memory_space<vmem>>) attributes {dimension_semantics = [#tpu.dimension_semantics<arbitrary>, #tpu.dimension_semantics<arbitrary>, #tpu.dimension_semantics<arbitrary>], iteration_bounds = array<i64: 5, 2, 2>, scalar_prefetch = 0 : i64, scratch_operands = 2 : i64, tpu.core_type = #tpu.core_type<tc>, window_params = [{transform_indices = @transform_0, window_bounds = array<i64: 256, 256>}, {transform_indices = @transform_1, window_bounds = array<i64: 256, 128>}, {transform_indices = @transform_2, window_bounds = array<i64: 1, 128, 128>}, {transform_indices = @transform_3, window_bounds = array<i64: 1, 1, 128>}, {transform_indices = @transform_4, window_bounds = array<i64: 1, 128, 128>}, {transform_indices = @transform_5, window_bounds = array<i64: 1, 1, 128>}, {transform_indices = @transform_6, window_bounds = array<i64: 1, 1, 128>}, {transform_indices = @transform_7, window_bounds = array<i64: 1, 1, 128>}, {transform_indices = @transform_8, window_bounds = array<i64: 256, 128>}]} {
    %c2_i32 = arith.constant 2 : i32
    %c0_i32 = arith.constant 0 : i32
    %0 = arith.cmpi eq, %c2_i32, %c0_i32 : i32
    %c1_i32 = arith.constant 1 : i32
    %1 = arith.select %0, %c1_i32, %c2_i32 : i32
    %2 = arith.remsi %arg0, %1 : i32
    %c0_i32_0 = arith.constant 0 : i32
    %3 = arith.cmpi ne, %2, %c0_i32_0 : i32
    %c0_i32_1 = arith.constant 0 : i32
    %4 = arith.cmpi slt, %2, %c0_i32_1 : i32
    %c0_i32_2 = arith.constant 0 : i32
    %5 = arith.cmpi slt, %1, %c0_i32_2 : i32
    %6 = arith.xori %4, %5 : i1
    %7 = arith.andi %6, %3 : i1
    %8 = arith.addi %2, %1 : i32
    %9 = arith.select %7, %8, %2 : i32
    %c512_i32 = arith.constant 512 : i32
    %10 = arith.muli %9, %c512_i32 : i32
    %c1_i32_3 = arith.constant 1 : i32
    %11 = arith.addi %arg0, %c1_i32_3 : i32
    %c2_i32_4 = arith.constant 2 : i32
    %c0_i32_5 = arith.constant 0 : i32
    %12 = arith.cmpi eq, %c2_i32_4, %c0_i32_5 : i32
    %c1_i32_6 = arith.constant 1 : i32
    %13 = arith.select %12, %c1_i32_6, %c2_i32_4 : i32
    %14 = arith.remsi %11, %13 : i32
    %c0_i32_7 = arith.constant 0 : i32
    %15 = arith.cmpi ne, %14, %c0_i32_7 : i32
    %c0_i32_8 = arith.constant 0 : i32
    %16 = arith.cmpi slt, %14, %c0_i32_8 : i32
    %c0_i32_9 = arith.constant 0 : i32
    %17 = arith.cmpi slt, %13, %c0_i32_9 : i32
    %18 = arith.xori %16, %17 : i1
    %19 = arith.andi %18, %15 : i1
    %20 = arith.addi %14, %13 : i32
    %21 = arith.select %19, %20, %14 : i32
    %c512_i32_10 = arith.constant 512 : i32
    %22 = arith.muli %21, %c512_i32_10 : i32
    %c0_i32_11 = arith.constant 0 : i32
    %23 = arith.cmpi eq, %arg0, %c0_i32_11 : i32
    %c0_i32_12 = arith.constant 0 : i32
    %24 = arith.cmpi eq, %arg1, %c0_i32_12 : i32
    %25 = arith.andi %23, %24 : i1
    %26 = arith.extui %25 : i1 to i32
    %c0_i32_13 = arith.constant 0 : i32
    %27 = arith.cmpi ne, %26, %c0_i32_13 : i32
    scf.if %27 {
      %c0_24 = arith.constant 0 : index
      %c0_25 = arith.constant 0 : index
      %44 = vector.load %arg4[%c0_24, %c0_25] : memref<256x128xbf16, #tpu.memory_space<vmem>>, vector<256x128xbf16>
      %c256_i32_26 = arith.constant 256 : i32
      %45 = arith.muli %arg2, %c256_i32_26 : i32
      %46 = tpu.assume_multiple %45, 256 : i32
      %47 = arith.index_cast %46 : i32 to index
      %c0_27 = arith.constant 0 : index
      %48 = vector.load %arg13[%47, %c0_27] : memref<1024x128xbf16, #tpu.memory_space<vmem>>, vector<256x128xbf16>
      tpu.vector_store %arg13[%47, %c0_27], %44 {strides = array<i32>} : memref<1024x128xbf16, #tpu.memory_space<vmem>>, vector<256x128xbf16>,
    } else {
    }
    %c0_i32_14 = arith.constant 0 : i32
    %28 = arith.cmpi eq, %arg2, %c0_i32_14 : i32
    %29 = arith.extui %28 : i1 to i32
    %c0_i32_15 = arith.constant 0 : i32
    %30 = arith.cmpi ne, %29, %c0_i32_15 : i32
    scf.if %30 {
      %cst_24 = arith.constant 0.000000e+00 : f32
      %44 = vector.broadcast %cst_24 : f32 to vector<256x128xf32>
      %c0_25 = arith.constant 0 : index
      %c0_26 = arith.constant 0 : index
      %45 = vector.load %arg12[%c0_25, %c0_26] : memref<256x128xf32, #tpu.memory_space<vmem>>, vector<256x128xf32>
      tpu.vector_store %arg12[%c0_25, %c0_26], %44 {strides = array<i32>} : memref<256x128xf32, #tpu.memory_space<vmem>>, vector<256x128xf32>,
    } else {
    }
    %c256_i32 = arith.constant 256 : i32
    %31 = arith.muli %arg2, %c256_i32 : i32
    %32 = arith.addi %10, %31 : i32
    %33 = tpu.assume_multiple %32, 256 : i32
    %34 = arith.index_cast %33 : i32 to index
    %c0 = arith.constant 0 : index
    %35 = vector.load %arg13[%34, %c0] : memref<1024x128xbf16, #tpu.memory_space<vmem>>, vector<256x128xbf16>
    %c0_16 = arith.constant 0 : index
    %c0_17 = arith.constant 0 : index
    %36 = vector.load %arg12[%c0_16, %c0_17] : memref<256x128xf32, #tpu.memory_space<vmem>>, vector<256x128xf32>
    %c0_18 = arith.constant 0 : index
    %c0_19 = arith.constant 0 : index
    %37 = vector.load %arg3[%c0_18, %c0_19] : memref<256x256xbf16, #tpu.memory_space<vmem>>, vector<256x256xbf16>
    %cst = arith.constant dense<0.000000e+00> : vector<256x128xf32>
    %38 = tpu.matmul %37, %35, %cst {dimension_numbers = #tpu.dot_dimension_numbers<[1], [0], [0], [1], [0, 0, 1, 1], [], []>} : vector<256x256xbf16>, vector<256x128xbf16>, vector<256x128xf32> -> vector<256x128xf32>
    %39 = arith.addf %36, %38 : vector<256x128xf32>
    %c0_20 = arith.constant 0 : index
    %c0_21 = arith.constant 0 : index
    %40 = vector.load %arg12[%c0_20, %c0_21] : memref<256x128xf32, #tpu.memory_space<vmem>>, vector<256x128xf32>
    tpu.vector_store %arg12[%c0_20, %c0_21], %39 {strides = array<i32>} : memref<256x128xf32, #tpu.memory_space<vmem>>, vector<256x128xf32>,
    %c1_i32_22 = arith.constant 1 : i32
    %41 = arith.cmpi eq, %arg2, %c1_i32_22 : i32
    %42 = arith.extui %41 : i1 to i32
    %c0_i32_23 = arith.constant 0 : i32
    %43 = arith.cmpi ne, %42, %c0_i32_23 : i32
    scf.if %43 {
      %c0_24 = arith.constant 0 : index
      %c0_25 = arith.constant 0 : index
      %44 = vector.load %arg12[%c0_24, %c0_25] : memref<256x128xf32, #tpu.memory_space<vmem>>, vector<256x128xf32>
      %45 = arith.truncf %44 : vector<256x128xf32> to vector<256x128xbf16>
      %c0_26 = arith.constant 0 : index
      %c0_27 = arith.constant 0 : index
      %c0_28 = arith.constant 0 : index
      %46 = vector.load %arg5[%c0_26, %c0_27, %c0_28] : memref<1x128x128xbf16, #tpu.memory_space<vmem>>, vector<1x128x128xbf16>
      %47 = vector.shape_cast %46 : vector<1x128x128xbf16> to vector<128x128xbf16>
      %cst_29 = arith.constant dense<0.000000e+00> : vector<256x128xf32>
      %48 = tpu.matmul %45, %47, %cst_29 {dimension_numbers = #tpu.dot_dimension_numbers<[1], [0], [0], [1], [0, 0, 1, 1], [], []>} : vector<256x128xbf16>, vector<128x128xbf16>, vector<256x128xf32> -> vector<256x128xf32>
      %c0_30 = arith.constant 0 : index
      %c0_31 = arith.constant 0 : index
      %c0_32 = arith.constant 0 : index
      %49 = vector.load %arg6[%c0_30, %c0_31, %c0_32] : memref<1x1x128xf32, #tpu.memory_space<vmem>>, vector<1x1x128xf32>
      %50 = vector.shape_cast %49 : vector<1x1x128xf32> to vector<1x128xf32>
      %51 = vector.broadcast %50 : vector<1x128xf32> to vector<256x128xf32>
      %52 = arith.addf %48, %51 : vector<256x128xf32>
      %cst_33 = arith.constant 0.000000e+00 : f32
      %53 = vector.broadcast %cst_33 : f32 to vector<256x128xf32>
      %54 = arith.maximumf %52, %53 : vector<256x128xf32>
      %55 = arith.truncf %54 : vector<256x128xf32> to vector<256x128xbf16>
      %c0_34 = arith.constant 0 : index
      %c0_35 = arith.constant 0 : index
      %c0_36 = arith.constant 0 : index
      %56 = vector.load %arg7[%c0_34, %c0_35, %c0_36] : memref<1x128x128xbf16, #tpu.memory_space<vmem>>, vector<1x128x128xbf16>
      %57 = vector.shape_cast %56 : vector<1x128x128xbf16> to vector<128x128xbf16>
      %cst_37 = arith.constant dense<0.000000e+00> : vector<256x128xf32>
      %58 = tpu.matmul %55, %57, %cst_37 {dimension_numbers = #tpu.dot_dimension_numbers<[1], [0], [0], [1], [0, 0, 1, 1], [], []>} : vector<256x128xbf16>, vector<128x128xbf16>, vector<256x128xf32> -> vector<256x128xf32>
      %c0_38 = arith.constant 0 : index
      %c0_39 = arith.constant 0 : index
      %c0_40 = arith.constant 0 : index
      %59 = vector.load %arg8[%c0_38, %c0_39, %c0_40] : memref<1x1x128xf32, #tpu.memory_space<vmem>>, vector<1x1x128xf32>
      %60 = vector.shape_cast %59 : vector<1x1x128xf32> to vector<1x128xf32>
      %61 = vector.broadcast %60 : vector<1x128xf32> to vector<256x128xf32>
      %62 = arith.addf %58, %61 : vector<256x128xf32>
      %cst_41 = arith.constant 0.000000e+00 : f32
      %63 = vector.broadcast %cst_41 : f32 to vector<256x128xf32>
      %64 = arith.maximumf %62, %63 : vector<256x128xf32>
      %c0_42 = arith.constant 0 : index
      %c0_43 = arith.constant 0 : index
      %c0_44 = arith.constant 0 : index
      %65 = vector.load %arg9[%c0_42, %c0_43, %c0_44] : memref<1x1x128xf32, #tpu.memory_space<vmem>>, vector<1x1x128xf32>
      %66 = vector.shape_cast %65 : vector<1x1x128xf32> to vector<1x128xf32>
      %67 = vector.broadcast %66 : vector<1x128xf32> to vector<256x128xf32>
      %68 = arith.mulf %64, %67 : vector<256x128xf32>
      %c0_45 = arith.constant 0 : index
      %c0_46 = arith.constant 0 : index
      %c0_47 = arith.constant 0 : index
      %69 = vector.load %arg10[%c0_45, %c0_46, %c0_47] : memref<1x1x128xf32, #tpu.memory_space<vmem>>, vector<1x1x128xf32>
      %70 = vector.shape_cast %69 : vector<1x1x128xf32> to vector<1x128xf32>
      %71 = vector.broadcast %70 : vector<1x128xf32> to vector<256x128xf32>
      %72 = arith.addf %68, %71 : vector<256x128xf32>
      %73 = arith.truncf %72 : vector<256x128xf32> to vector<256x128xbf16>
      %c256_i32_48 = arith.constant 256 : i32
      %74 = arith.muli %arg1, %c256_i32_48 : i32
      %75 = arith.addi %22, %74 : i32
      %76 = tpu.assume_multiple %75, 256 : i32
      %77 = arith.index_cast %76 : i32 to index
      %c0_49 = arith.constant 0 : index
      %78 = vector.load %arg13[%77, %c0_49] : memref<1024x128xbf16, #tpu.memory_space<vmem>>, vector<256x128xbf16>
      tpu.vector_store %arg13[%77, %c0_49], %73 {strides = array<i32>} : memref<1024x128xbf16, #tpu.memory_space<vmem>>, vector<256x128xbf16>,
      %c0_50 = arith.constant 0 : index
      %c0_51 = arith.constant 0 : index
      %79 = vector.load %arg11[%c0_50, %c0_51] : memref<256x128xf32, #tpu.memory_space<vmem>>, vector<256x128xf32>
      tpu.vector_store %arg11[%c0_50, %c0_51], %72 {strides = array<i32>} : memref<256x128xf32, #tpu.memory_space<vmem>>, vector<256x128xf32>,
    } else {
    }
    return
  }
  func.func @transform_0(%arg0: i32, %arg1: i32, %arg2: i32) -> (i32, i32) {
    %c0_i32 = arith.constant 0 : i32
    return %arg1, %arg2 : i32, i32
  }
  func.func @transform_1(%arg0: i32, %arg1: i32, %arg2: i32) -> (i32, i32) {
    %c0_i32 = arith.constant 0 : i32
    %c0_i32_0 = arith.constant 0 : i32
    return %arg2, %c0_i32 : i32, i32
  }
  func.func @transform_2(%arg0: i32, %arg1: i32, %arg2: i32) -> (i32, i32, i32) {
    %c0_i32 = arith.constant 0 : i32
    %c0_i32_0 = arith.constant 0 : i32
    %c0_i32_1 = arith.constant 0 : i32
    return %arg0, %c0_i32, %c0_i32_0 : i32, i32, i32
  }
  func.func @transform_3(%arg0: i32, %arg1: i32, %arg2: i32) -> (i32, i32, i32) {
    %c0_i32 = arith.constant 0 : i32
    %c0_i32_0 = arith.constant 0 : i32
    %c0_i32_1 = arith.constant 0 : i32
    return %arg0, %c0_i32, %c0_i32_0 : i32, i32, i32
  }
  func.func @transform_4(%arg0: i32, %arg1: i32, %arg2: i32) -> (i32, i32, i32) {
    %c0_i32 = arith.constant 0 : i32
    %c0_i32_0 = arith.constant 0 : i32
    %c0_i32_1 = arith.constant 0 : i32
    return %arg0, %c0_i32, %c0_i32_0 : i32, i32, i32
  }
  func.func @transform_5(%arg0: i32, %arg1: i32, %arg2: i32) -> (i32, i32, i32) {
    %c0_i32 = arith.constant 0 : i32
    %c0_i32_0 = arith.constant 0 : i32
    %c0_i32_1 = arith.constant 0 : i32
    return %arg0, %c0_i32, %c0_i32_0 : i32, i32, i32
  }
  func.func @transform_6(%arg0: i32, %arg1: i32, %arg2: i32) -> (i32, i32, i32) {
    %c0_i32 = arith.constant 0 : i32
    %c0_i32_0 = arith.constant 0 : i32
    %c0_i32_1 = arith.constant 0 : i32
    return %arg0, %c0_i32, %c0_i32_0 : i32, i32, i32
  }
  func.func @transform_7(%arg0: i32, %arg1: i32, %arg2: i32) -> (i32, i32, i32) {
    %c0_i32 = arith.constant 0 : i32
    %c0_i32_0 = arith.constant 0 : i32
    %c0_i32_1 = arith.constant 0 : i32
    return %arg0, %c0_i32, %c0_i32_0 : i32, i32, i32
  }
  func.func @transform_8(%arg0: i32, %arg1: i32, %arg2: i32) -> (i32, i32) {
    %c0_i32 = arith.constant 0 : i32
    %c0_i32_0 = arith.constant 0 : i32
    return %arg1, %c0_i32 : i32, i32
  }
}

</mosaic_0001>

<llo_original>
// kernel: tpu_custom_call.1
$region0: #{tpu_custom_call.1}
  #allocation0 [shape = 'u32[]', space=smem, size = 0x4, offset = 0x4, fixed_abs, tag = 'smem constant byte address 0x4 - core index']
  #allocation1 [shape = 'u32[144,128]{1,0:T(1,128)}', space=vmem, size = 0x12000, scoped, tag = 'internal scratch']
  #allocation2 [shape = 'f32[256,128]{1,0:T(8,128)}', space=vmem, size = 0x20000, scoped, tag = 'scratch operand']
  #allocation3 [shape = 'bf16[1024,128]{1,0:T(16,128)(2,1)}', space=vmem, size = 0x40000, scoped, tag = 'scratch operand']
  %s0 = inlined_call_operand.hbm [shape: bf16[512,512], index: 0, kind: input, shape index: {}]
  %s1 = inlined_call_operand.hbm [shape: bf16[512,128], index: 1, kind: input, shape index: {}]
  %s2 = inlined_call_operand.hbm [shape: bf16[5,128,128], index: 2, kind: input, shape index: {}]
  %s3 = inlined_call_operand.vmem [shape: f32[5,1,128], index: 3, kind: input, shape index: {}]
  %s4 = inlined_call_operand.hbm [shape: bf16[5,128,128], index: 4, kind: input, shape index: {}]
  %s5 = inlined_call_operand.vmem [shape: f32[5,1,128], index: 5, kind: input, shape index: {}]
  %s6 = inlined_call_operand.vmem [shape: f32[5,1,128], index: 6, kind: input, shape index: {}]
  %s7 = inlined_call_operand.vmem [shape: f32[5,1,128], index: 7, kind: input, shape index: {}]
  %s8 = inlined_call_operand.hbm [shape: f32[512,128], index: 8, kind: output, shape index: {}]
  %s9 = sld [smem:[#allocation0]]
  $region93: #{tpu_custom_call.1} parent=0
    _
  %s11 = ssub.s32 1, %s9
  %s12 = scalar_select 0, %s11, %s9
  $region1: #{tpu_custom_call.1} parent=0
    #allocation4 [shape = 'u8[262144]{0}', space=vmem, size = 0x40000, scoped, tag = 'input window, operand 0']
    #allocation5 [shape = 's32[2]{0}', space=sflag, size = 0x8, scoped, tag = 'scoped memory for tpu_custom_call.1']
    #allocation6 [shape = 's32[2]{0}', space=sflag, size = 0x8, scoped, tag = 'scoped memory for tpu_custom_call.1']
    #allocation7 [shape = 'u8[131072]{0}', space=vmem, size = 0x20000, scoped, tag = 'input window, operand 1']
    #allocation8 [shape = 's32[2]{0}', space=sflag, size = 0x8, scoped, tag = 'scoped memory for tpu_custom_call.1']
    #allocation9 [shape = 'u8[65536]{0}', space=vmem, size = 0x10000, scoped, tag = 'input window, operand 2']
    #allocation10 [shape = 'u8[65536]{0}', space=vmem, size = 0x10000, scoped, tag = 'input window, operand 4']
    #allocation11 [shape = 's32[2]{0}', space=sflag, size = 0x8, scoped, tag = 'scoped memory for tpu_custom_call.1']
    #allocation12 [shape = 'u8[262144]{0}', space=vmem, size = 0x40000, scoped, tag = 'output window, operand 0']
    %13 = vsyncpa [#allocation5], 0
    %s14 = scalar_lea.sflag [#allocation5], 1
    %15 = vsyncpa %s14, 0
    %16 = vsyncpa [#allocation8], 0
    %s17 = scalar_lea.sflag [#allocation8], 1
    %18 = vsyncpa %s17, 0
    %19 = vsyncpa [#allocation11], 0
    %s20 = scalar_lea.sflag [#allocation11], 1
    %21 = vsyncpa %s20, 0
    %22 = vsyncpa [#allocation6], 0
    %s23 = scalar_lea.sflag [#allocation6], 1
    %24 = vsyncpa %s23, 0
    loop: start=0, step=1, limit=22
    $region2: #{tpu_custom_call.1} parent=1 // loop_pre_header
      _
    $region3: #{tpu_custom_call.1} parent=1 // loop_header
      %s26 = sphi 0, %s30
      %p27 = scmp.ge.s32.totalorder %s26, 22
      %s33 = sphi 0, %s52
      %s34 = sphi 0, %s48
      %s35 = sphi 0, %s44
      %s36 = sphi 0, %s33
      %s37 = sphi 0, %s34
      %s38 = sphi 0, %s35
      %s39 = sphi 0, %s36
      %s40 = sphi 0, %s37
      %s41 = sphi 0, %s38
      %s57 = sphi 0, %s59
      %s60 = sphi 0, %s57
      %s61 = sphi 0, %s60
      %s77 = sphi 0, %s61
      %s83 = sphi 0, %s85
      %s86 = sphi 0, %s83
      %s87 = sphi 0, %s86
      %s103 = sphi 0, %s87
      %s109 = sphi 0, %s111
      %s112 = sphi 0, %s109
      %s113 = sphi 0, %s112
      %s129 = sphi 0, %s113
      %s135 = sphi 0, %s137
      %s138 = sphi 0, %s135
      %s139 = sphi 0, %s138
      %s155 = sphi 0, %s139
      %s161 = sphi 0, %s163
      %s164 = sphi 0, %s161
      %s165 = sphi 0, %s164
      %s181 = sphi 0, %s165
      %s187 = sphi 0, %s189
      %s190 = sphi 0, %s187
      %s191 = sphi 0, %s190
      %s207 = sphi 0, %s191
      %s213 = sphi 0, %s215
      %s216 = sphi 0, %s213
      %s217 = sphi 0, %s216
      %s233 = sphi 0, %s217
      %s239 = sphi 0, %s241
      %s242 = sphi 0, %s239
      %s243 = sphi 0, %s242
      %s259 = sphi 0, %s243
      %s265 = sphi 0, %s267
      %s268 = sphi 0, %s265
      %s269 = sphi 0, %s268
      %s285 = sphi 0, %s269
    $region4: #{tpu_custom_call.1} parent=1 // loop_header_branch
      %29 = sbr.rel (%p27) target = $region8
    $region5: #{tpu_custom_call.1} parent=1 // loop_body
      %s31 = ssub.s32 %s26, 1
      %s32 = ssub.s32 %s26, 2
      %s42 = sadd.s32 1, %s35
      %p43 = scmp.ge.s32.totalorder %s42, 2
      %s44 = scalar_select %p43, 0, %s42
      %s45 = sadd.s32 1, %s34
      %s46 = scalar_select %p43, %s45, %s34
      %p47 = scmp.ge.s32.totalorder %s46, 2
      %s48 = scalar_select %p47, 0, %s46
      %s49 = sadd.s32 1, %s33
      %s50 = scalar_select %p47, %s49, %s33
      %p51 = scmp.ge.s32.totalorder %s50, 5
      %s52 = scalar_select %p51, 0, %s50
      %s53 = ssub.s32 %s34, %s48
      %s54 = ssub.s32 %s35, %s44
      %s55 = sor.u32 %s53, %s54
      %p56 = scmp.eq.s32.totalorder %s55, 0
      %s58 = sadd.s32 %s57, 1
      %s59 = scalar_select %p56, %s57, %s58
      %p62 = pneg %p56
      %p63 = scmp.eq.s32.totalorder %s26, 19
      %p64 = por %p62, %p63
      %p65 = scmp.ne.s32.totalorder %s57, %s60
      %p66 = scmp.eq.s32.totalorder %s26, 0
      %p67 = por %p65, %p66
      %p68 = scmp.ne.s32.totalorder %s57, %s60
      %p69 = scmp.eq.s32.totalorder %s31, 19
      %p70 = por %p68, %p69
      %p71 = scmp.ne.s32.totalorder %s60, %s61
      %p72 = scmp.eq.s32.totalorder %s31, 0
      %p73 = por %p71, %p72
      %p74 = scmp.ne.s32.totalorder %s60, %s61
      %p75 = scmp.eq.s32.totalorder %s32, 19
      %p76 = por %p74, %p75
      %p78 = scmp.ne.s32.totalorder %s61, %s77
      %p79 = scmp.eq.s32.totalorder %s32, 0
      %p80 = por %p78, %p79
      %s81 = ssub.s32 %s35, %s44
      %p82 = scmp.eq.s32.totalorder %s81, 0
      %s84 = sadd.s32 %s83, 1
      %s85 = scalar_select %p82, %s83, %s84
      %p88 = pneg %p82
      %p89 = scmp.eq.s32.totalorder %s26, 19
      %p90 = por %p88, %p89
      %p91 = scmp.ne.s32.totalorder %s83, %s86
      %p92 = scmp.eq.s32.totalorder %s26, 0
      %p93 = por %p91, %p92
      %p94 = scmp.ne.s32.totalorder %s83, %s86
      %p95 = scmp.eq.s32.totalorder %s31, 19
      %p96 = por %p94, %p95
      %p97 = scmp.ne.s32.totalorder %s86, %s87
      %p98 = scmp.eq.s32.totalorder %s31, 0
      %p99 = por %p97, %p98
      %p100 = scmp.ne.s32.totalorder %s86, %s87
      %p101 = scmp.eq.s32.totalorder %s32, 19
      %p102 = por %p100, %p101
      %p104 = scmp.ne.s32.totalorder %s87, %s103
      %p105 = scmp.eq.s32.totalorder %s32, 0
      %p106 = por %p104, %p105
      %s107 = ssub.s32 %s33, %s52
      %p108 = scmp.eq.s32.totalorder %s107, 0
      %s110 = sadd.s32 %s109, 1
      %s111 = scalar_select %p108, %s109, %s110
      %p114 = pneg %p108
      %p115 = scmp.eq.s32.totalorder %s26, 19
      %p116 = por %p114, %p115
      %p117 = scmp.ne.s32.totalorder %s109, %s112
      %p118 = scmp.eq.s32.totalorder %s26, 0
      %p119 = por %p117, %p118
      %p120 = scmp.ne.s32.totalorder %s109, %s112
      %p121 = scmp.eq.s32.totalorder %s31, 19
      %p122 = por %p120, %p121
      %p123 = scmp.ne.s32.totalorder %s112, %s113
      %p124 = scmp.eq.s32.totalorder %s31, 0
      %p125 = por %p123, %p124
      %p126 = scmp.ne.s32.totalorder %s112, %s113
      %p127 = scmp.eq.s32.totalorder %s32, 19
      %p128 = por %p126, %p127
      %p130 = scmp.ne.s32.totalorder %s113, %s129
      %p131 = scmp.eq.s32.totalorder %s32, 0
      %p132 = por %p130, %p131
      %s133 = ssub.s32 %s33, %s52
      %p134 = scmp.eq.s32.totalorder %s133, 0
      %s136 = sadd.s32 %s135, 1
      %s137 = scalar_select %p134, %s135, %s136
      %p140 = pneg %p134
      %p141 = scmp.eq.s32.totalorder %s26, 19
      %p142 = por %p140, %p141
      %p143 = scmp.ne.s32.totalorder %s135, %s138
      %p144 = scmp.eq.s32.totalorder %s26, 0
      %p145 = por %p143, %p144
      %p146 = scmp.ne.s32.totalorder %s135, %s138
      %p147 = scmp.eq.s32.totalorder %s31, 19
      %p148 = por %p146, %p147
      %p149 = scmp.ne.s32.totalorder %s138, %s139
      %p150 = scmp.eq.s32.totalorder %s31, 0
      %p151 = por %p149, %p150
      %p152 = scmp.ne.s32.totalorder %s138, %s139
      %p153 = scmp.eq.s32.totalorder %s32, 19
      %p154 = por %p152, %p153
      %p156 = scmp.ne.s32.totalorder %s139, %s155
      %p157 = scmp.eq.s32.totalorder %s32, 0
      %p158 = por %p156, %p157
      %s159 = ssub.s32 %s33, %s52
      %p160 = scmp.eq.s32.totalorder %s159, 0
      %s162 = sadd.s32 %s161, 1
      %s163 = scalar_select %p160, %s161, %s162
      %p166 = pneg %p160
      %p167 = scmp.eq.s32.totalorder %s26, 19
      %p168 = por %p166, %p167
      %p169 = scmp.ne.s32.totalorder %s161, %s164
      %p170 = scmp.eq.s32.totalorder %s26, 0
      %p171 = por %p169, %p170
      %p172 = scmp.ne.s32.totalorder %s161, %s164
      %p173 = scmp.eq.s32.totalorder %s31, 19
      %p174 = por %p172, %p173
      %p175 = scmp.ne.s32.totalorder %s164, %s165
      %p176 = scmp.eq.s32.totalorder %s31, 0
      %p177 = por %p175, %p176
      %p178 = scmp.ne.s32.totalorder %s164, %s165
      %p179 = scmp.eq.s32.totalorder %s32, 19
      %p180 = por %p178, %p179
      %p182 = scmp.ne.s32.totalorder %s165, %s181
      %p183 = scmp.eq.s32.totalorder %s32, 0
      %p184 = por %p182, %p183
      %s185 = ssub.s32 %s33, %s52
      %p186 = scmp.eq.s32.totalorder %s185, 0
      %s188 = sadd.s32 %s187, 1
      %s189 = scalar_select %p186, %s187, %s188
      %p192 = pneg %p186
      %p193 = scmp.eq.s32.totalorder %s26, 19
      %p194 = por %p192, %p193
      %p195 = scmp.ne.s32.totalorder %s187, %s190
      %p196 = scmp.eq.s32.totalorder %s26, 0
      %p197 = por %p195, %p196
      %p198 = scmp.ne.s32.totalorder %s187, %s190
      %p199 = scmp.eq.s32.totalorder %s31, 19
      %p200 = por %p198, %p199
      %p201 = scmp.ne.s32.totalorder %s190, %s191
      %p202 = scmp.eq.s32.totalorder %s31, 0
      %p203 = por %p201, %p202
      %p204 = scmp.ne.s32.totalorder %s190, %s191
      %p205 = scmp.eq.s32.totalorder %s32, 19
      %p206 = por %p204, %p205
      %p208 = scmp.ne.s32.totalorder %s191, %s207
      %p209 = scmp.eq.s32.totalorder %s32, 0
      %p210 = por %p208, %p209
      %s211 = ssub.s32 %s33, %s52
      %p212 = scmp.eq.s32.totalorder %s211, 0
      %s214 = sadd.s32 %s213, 1
      %s215 = scalar_select %p212, %s213, %s214
      %p218 = pneg %p212
      %p219 = scmp.eq.s32.totalorder %s26, 19
      %p220 = por %p218, %p219
      %p221 = scmp.ne.s32.totalorder %s213, %s216
      %p222 = scmp.eq.s32.totalorder %s26, 0
      %p223 = por %p221, %p222
      %p224 = scmp.ne.s32.totalorder %s213, %s216
      %p225 = scmp.eq.s32.totalorder %s31, 19
      %p226 = por %p224, %p225
      %p227 = scmp.ne.s32.totalorder %s216, %s217
      %p228 = scmp.eq.s32.totalorder %s31, 0
      %p229 = por %p227, %p228
      %p230 = scmp.ne.s32.totalorder %s216, %s217
      %p231 = scmp.eq.s32.totalorder %s32, 19
      %p232 = por %p230, %p231
      %p234 = scmp.ne.s32.totalorder %s217, %s233
      %p235 = scmp.eq.s32.totalorder %s32, 0
      %p236 = por %p234, %p235
      %s237 = ssub.s32 %s33, %s52
      %p238 = scmp.eq.s32.totalorder %s237, 0
      %s240 = sadd.s32 %s239, 1
      %s241 = scalar_select %p238, %s239, %s240
      %p244 = pneg %p238
      %p245 = scmp.eq.s32.totalorder %s26, 19
      %p246 = por %p244, %p245
      %p247 = scmp.ne.s32.totalorder %s239, %s242
      %p248 = scmp.eq.s32.totalorder %s26, 0
      %p249 = por %p247, %p248
      %p250 = scmp.ne.s32.totalorder %s239, %s242
      %p251 = scmp.eq.s32.totalorder %s31, 19
      %p252 = por %p250, %p251
      %p253 = scmp.ne.s32.totalorder %s242, %s243
      %p254 = scmp.eq.s32.totalorder %s31, 0
      %p255 = por %p253, %p254
      %p256 = scmp.ne.s32.totalorder %s242, %s243
      %p257 = scmp.eq.s32.totalorder %s32, 19
      %p258 = por %p256, %p257
      %p260 = scmp.ne.s32.totalorder %s243, %s259
      %p261 = scmp.eq.s32.totalorder %s32, 0
      %p262 = por %p260, %p261
      %s263 = ssub.s32 %s34, %s48
      %p264 = scmp.eq.s32.totalorder %s263, 0
      %s266 = sadd.s32 %s265, 1
      %s267 = scalar_select %p264, %s265, %s266
      %p270 = pneg %p264
      %p271 = scmp.eq.s32.totalorder %s26, 19
      %p272 = por %p270, %p271
      %p273 = scmp.ne.s32.totalorder %s265, %s268
      %p274 = scmp.eq.s32.totalorder %s26, 0
      %p275 = por %p273, %p274
      %p276 = scmp.ne.s32.totalorder %s265, %s268
      %p277 = scmp.eq.s32.totalorder %s31, 19
      %p278 = por %p276, %p277
      %p279 = scmp.ne.s32.totalorder %s268, %s269
      %p280 = scmp.eq.s32.totalorder %s31, 0
      %p281 = por %p279, %p280
      %p282 = scmp.ne.s32.totalorder %s268, %s269
      %p283 = scmp.eq.s32.totalorder %s32, 19
      %p284 = por %p282, %p283
      %p286 = scmp.ne.s32.totalorder %s269, %s285
      %p287 = scmp.eq.s32.totalorder %s32, 0
      %p288 = por %p286, %p287
      %p289 = scmp.le.s32.totalorder 1, %s26
      %p290 = scmp.lt.s32.totalorder %s26, 21
      %p291 = pnand %p289, %p290
      %p292 = pneg %p291
      // Predicated region
      $region9: #{tpu_custom_call.1} parent=5 // pred_check
        _
      $region10: #{tpu_custom_call.1} parent=5 // pred_check_branch
        %294 = sbr.rel (%p291) target = $region12
      $region11: #{tpu_custom_call.1} parent=5 // pred_region
        %s295 = ssub.s32 %s26, 1
      $region12: #{tpu_custom_call.1} parent=5 // pred_fallthru
        _
      %p296 = scmp.lt.s32.totalorder %s26, 20
      // Predicated region
      $region13: #{tpu_custom_call.1} parent=5 // pred_check
        %p297 = pneg %p296
      $region14: #{tpu_custom_call.1} parent=5 // pred_check_branch
        %299 = sbr.rel (%p297) target = $region16
      $region15: #{tpu_custom_call.1} parent=5 // pred_region
        // Predicated region
        $region17: #{tpu_custom_call.1} parent=15 // pred_check
          %p300 = pneg %p67
        $region18: #{tpu_custom_call.1} parent=15 // pred_check_branch
          %302 = sbr.rel (%p300) target = $region20
        $region19: #{tpu_custom_call.1} parent=15 // pred_region
          %s303 = sand.u32 %s57, 1
          %s304 = scalar_lea.sflag [#allocation5], %s303
          %s305 = sand.u32 %s57, 1
          %s306 = smul.addr %s305, 256
          %s307 = scalar_lea.vmem [#allocation4], %s306
          %s308 = smul.u32 32, %s34
          %s309 = smul.u32 2, %s35
          %s311 = ssub.s32 4096, 4096
          %312 = vsyncadd %s304, %s311
          %s313 = smul.addr %s308, 4
          %s314 = sadd.s32 %s309, %s313
          %s315 = smul.addr %s314, 64
          %s316 = scalar_lea.hbm %s0, %s315
          %s317 = sshll.u32 %s307, 4
          %s318 = int_to_ptr.vmem [resolvable:$true] %s317
          %323 = dma.hbm_to_vmem [thread:$0]  %s316, 4096, %s318, %s304, 256, 128, 8
        $region20: #{tpu_custom_call.1} parent=15 // pred_fallthru
          _
        // Predicated region
        $region21: #{tpu_custom_call.1} parent=15 // pred_check
          %p324 = pneg %p93
        $region22: #{tpu_custom_call.1} parent=15 // pred_check_branch
          %326 = sbr.rel (%p324) target = $region24
        $region23: #{tpu_custom_call.1} parent=15 // pred_region
          %s327 = sand.u32 %s26, 1
          %s328 = scalar_lea.sflag [#allocation8], %s327
          %s329 = sand.u32 %s83, 1
          %s330 = smul.addr %s329, 128
          %s331 = scalar_lea.vmem [#allocation7], %s330
          %s332 = smul.u32 32, %s35
          %s334 = ssub.s32 2048, 2048
          %335 = vsyncadd %s328, %s334
          %s336 = smul.addr %s332, 64
          %s337 = scalar_lea.hbm %s1, %s336
          %s338 = sshll.u32 %s331, 4
          %s339 = int_to_ptr.vmem [resolvable:$true] %s338
          %344 = dma.hbm_to_vmem [thread:$0]  %s337, 2048, %s339, %s328, 64, 64, 4
        $region24: #{tpu_custom_call.1} parent=15 // pred_fallthru
          _
        // Predicated region
        $region25: #{tpu_custom_call.1} parent=15 // pred_check
          %p345 = pneg %p119
        $region26: #{tpu_custom_call.1} parent=15 // pred_check_branch
          %347 = sbr.rel (%p345) target = $region28
        $region27: #{tpu_custom_call.1} parent=15 // pred_region
          %s348 = sand.u32 %s26, 1
          %s349 = scalar_lea.sflag [#allocation8], %s348
          %s350 = sand.u32 %s109, 1
          %s351 = smul.addr %s350, 64
          %s352 = scalar_lea.vmem [#allocation9], %s351
          %s354 = ssub.s32 1024, 1024
          %355 = vsyncadd %s349, %s354
          %s356 = smul.addr %s33, 16
          %s357 = smul.addr %s356, 64
          %s358 = scalar_lea.hbm %s2, %s357
          %s359 = sshll.u32 %s352, 4
          %s360 = int_to_ptr.vmem [resolvable:$true] %s359
          %365 = dma.hbm_to_vmem [thread:$0]  %s358, 1024, %s360, %s349, 64, 64, 4
        $region28: #{tpu_custom_call.1} parent=15 // pred_fallthru
          _
        // Predicated region
        $region29: #{tpu_custom_call.1} parent=15 // pred_check
          %p366 = pneg %p145
        $region30: #{tpu_custom_call.1} parent=15 // pred_check_branch
          %368 = sbr.rel (%p366) target = $region32
        $region31: #{tpu_custom_call.1} parent=15 // pred_region
          %p369 = scmp.lt.s32.totalorder %s33, 4
          %s370 = scalar_select %p369, %s33, 4
          %s371 = scalar_lea.vmem %s3, %s370
        $region32: #{tpu_custom_call.1} parent=15 // pred_fallthru
          _
        // Predicated region
        $region33: #{tpu_custom_call.1} parent=15 // pred_check
          %p372 = pneg %p171
        $region34: #{tpu_custom_call.1} parent=15 // pred_check_branch
          %374 = sbr.rel (%p372) target = $region36
        $region35: #{tpu_custom_call.1} parent=15 // pred_region
          %s375 = sand.u32 %s161, 1
          %s376 = scalar_lea.sflag [#allocation11], %s375
          %s377 = sand.u32 %s161, 1
          %s378 = smul.addr %s377, 64
          %s379 = scalar_lea.vmem [#allocation10], %s378
          %s381 = ssub.s32 1024, 1024
          %382 = vsyncadd %s376, %s381
          %s383 = smul.addr %s33, 16
          %s384 = smul.addr %s383, 64
          %s385 = scalar_lea.hbm %s4, %s384
          %s386 = sshll.u32 %s379, 4
          %s387 = int_to_ptr.vmem [resolvable:$true] %s386
          %392 = dma.hbm_to_vmem [thread:$0]  %s385, 1024, %s387, %s376, 64, 64, 4
        $region36: #{tpu_custom_call.1} parent=15 // pred_fallthru
          _
        // Predicated region
        $region37: #{tpu_custom_call.1} parent=15 // pred_check
          %p393 = pneg %p197
        $region38: #{tpu_custom_call.1} parent=15 // pred_check_branch
          %395 = sbr.rel (%p393) target = $region40
        $region39: #{tpu_custom_call.1} parent=15 // pred_region
          %p396 = scmp.lt.s32.totalorder %s33, 4
          %s397 = scalar_select %p396, %s33, 4
          %s398 = scalar_lea.vmem %s5, %s397
        $region40: #{tpu_custom_call.1} parent=15 // pred_fallthru
          _
        // Predicated region
        $region41: #{tpu_custom_call.1} parent=15 // pred_check
          %p399 = pneg %p223
        $region42: #{tpu_custom_call.1} parent=15 // pred_check_branch
          %401 = sbr.rel (%p399) target = $region44
        $region43: #{tpu_custom_call.1} parent=15 // pred_region
          %p402 = scmp.lt.s32.totalorder %s33, 4
          %s403 = scalar_select %p402, %s33, 4
          %s404 = scalar_lea.vmem %s6, %s403
        $region44: #{tpu_custom_call.1} parent=15 // pred_fallthru
          _
        // Predicated region
        $region45: #{tpu_custom_call.1} parent=15 // pred_check
          %p405 = pneg %p249
        $region46: #{tpu_custom_call.1} parent=15 // pred_check_branch
          %407 = sbr.rel (%p405) target = $region48
        $region47: #{tpu_custom_call.1} parent=15 // pred_region
          %p408 = scmp.lt.s32.totalorder %s33, 4
          %s409 = scalar_select %p408, %s33, 4
          %s410 = scalar_lea.vmem %s7, %s409
        $region48: #{tpu_custom_call.1} parent=15 // pred_fallthru
          _
      $region16: #{tpu_custom_call.1} parent=5 // pred_fallthru
        _
      %p411 = scmp.le.s32.totalorder 1, %s26
      %p412 = scmp.lt.s32.totalorder %s26, 21
      %p413 = pnand %p411, %p412
      %p414 = pneg %p413
      // Predicated region
      $region49: #{tpu_custom_call.1} parent=5 // pred_check
        _
      $region50: #{tpu_custom_call.1} parent=5 // pred_check_branch
        %416 = sbr.rel (%p413) target = $region52
      $region51: #{tpu_custom_call.1} parent=5 // pred_region
        %s417 = ssub.s32 %s26, 1
        %s418 = sand.u32 %s60, 1
        %s419 = scalar_lea.sflag [#allocation5], %s418
        %s420 = sand.u32 %s60, 1
        %s421 = smul.addr %s420, 256
        %s422 = scalar_lea.vmem [#allocation4], %s421
        // Predicated region
        $region53: #{tpu_custom_call.1} parent=51 // pred_check
          %p423 = pneg %p73
        $region54: #{tpu_custom_call.1} parent=51 // pred_check_branch
          %425 = sbr.rel (%p423) target = $region56
        $region55: #{tpu_custom_call.1} parent=51 // pred_region
          %426 = dma.done %s419, 4096
        $region56: #{tpu_custom_call.1} parent=51 // pred_fallthru
          _
        %s427 = sand.u32 %s31, 1
        %s428 = scalar_lea.sflag [#allocation8], %s427
        %s429 = sand.u32 %s86, 1
        %s430 = smul.addr %s429, 128
        %s431 = scalar_lea.vmem [#allocation7], %s430
        // Predicated region
        $region57: #{tpu_custom_call.1} parent=51 // pred_check
          %p432 = pneg %p99
        $region58: #{tpu_custom_call.1} parent=51 // pred_check_branch
          %434 = sbr.rel (%p432) target = $region60
        $region59: #{tpu_custom_call.1} parent=51 // pred_region
          %435 = dma.done %s428, 2048
        $region60: #{tpu_custom_call.1} parent=51 // pred_fallthru
          _
        %s436 = sand.u32 %s31, 1
        %s437 = scalar_lea.sflag [#allocation8], %s436
        %s438 = sand.u32 %s112, 1
        %s439 = smul.addr %s438, 64
        %s440 = scalar_lea.vmem [#allocation9], %s439
        // Predicated region
        $region61: #{tpu_custom_call.1} parent=51 // pred_check
          %p441 = pneg %p125
        $region62: #{tpu_custom_call.1} parent=51 // pred_check_branch
          %443 = sbr.rel (%p441) target = $region64
        $region63: #{tpu_custom_call.1} parent=51 // pred_region
          %444 = dma.done %s437, 1024
        $region64: #{tpu_custom_call.1} parent=51 // pred_fallthru
          _
        %s445 = sand.u32 %s164, 1
        %s446 = scalar_lea.sflag [#allocation11], %s445
        %s447 = sand.u32 %s164, 1
        %s448 = smul.addr %s447, 64
        %s449 = scalar_lea.vmem [#allocation10], %s448
        // Predicated region
        $region65: #{tpu_custom_call.1} parent=51 // pred_check
          %p450 = pneg %p177
        $region66: #{tpu_custom_call.1} parent=51 // pred_check_branch
          %452 = sbr.rel (%p450) target = $region68
        $region67: #{tpu_custom_call.1} parent=51 // pred_region
          %453 = dma.done %s446, 1024
        $region68: #{tpu_custom_call.1} parent=51 // pred_fallthru
          _
        %s454 = sand.u32 %s60, 1
        %s455 = scalar_lea.sflag [#allocation5], %s454
        %s456 = sand.u32 %s60, 1
        %s457 = smul.addr %s456, 256
        %s458 = scalar_lea.vmem [#allocation4], %s457
        %p459 = pneg %p73
        %p460 = pneg %p70
        %s461 = sand.u32 %s31, 1
        %s462 = scalar_lea.sflag [#allocation8], %s461
        %s463 = sand.u32 %s86, 1
        %s464 = smul.addr %s463, 128
        %s465 = scalar_lea.vmem [#allocation7], %s464
        %p466 = pneg %p99
        %p467 = pneg %p96
        %s468 = sand.u32 %s31, 1
        %s469 = scalar_lea.sflag [#allocation8], %s468
        %s470 = sand.u32 %s112, 1
        %s471 = smul.addr %s470, 64
        %s472 = scalar_lea.vmem [#allocation9], %s471
        %p473 = pneg %p125
        %p474 = pneg %p122
        %p475 = scmp.lt.s32.totalorder %s36, 4
        %s476 = scalar_select %p475, %s36, 4
        %s477 = scalar_lea.vmem %s3, %s476
        %p478 = pneg %p151
        %p479 = pneg %p148
        %s480 = sand.u32 %s164, 1
        %s481 = scalar_lea.sflag [#allocation11], %s480
        %s482 = sand.u32 %s164, 1
        %s483 = smul.addr %s482, 64
        %s484 = scalar_lea.vmem [#allocation10], %s483
        %p485 = pneg %p177
        %p486 = pneg %p174
        %p487 = scmp.lt.s32.totalorder %s36, 4
        %s488 = scalar_select %p487, %s36, 4
        %s489 = scalar_lea.vmem %s5, %s488
        %p490 = pneg %p203
        %p491 = pneg %p200
        %p492 = scmp.lt.s32.totalorder %s36, 4
        %s493 = scalar_select %p492, %s36, 4
        %s494 = scalar_lea.vmem %s6, %s493
        %p495 = pneg %p229
        %p496 = pneg %p226
        %p497 = scmp.lt.s32.totalorder %s36, 4
        %s498 = scalar_select %p497, %s36, 4
        %s499 = scalar_lea.vmem %s7, %s498
        %p500 = pneg %p255
        %p501 = pneg %p252
        %p502 = pneg %p281
        %p503 = pneg %p278
        %s504 = sand.u32 %s268, 1
        %s505 = scalar_lea.sflag [#allocation6], %s504
        %s506 = sand.u32 %s268, 1
        %s507 = smul.addr %s506, 256
        %s508 = scalar_lea.vmem [#allocation12], %s507
        %s509 = smul.u32 32, %s37
        %s510 = smul.u32 2, %s38
        %s511 = smul.u32 32, %s38
        %p512 = scmp.lt.s32.totalorder %s36, 4
        %s513 = scalar_select %p512, %s36, 4
        %s514 = scalar_lea.vmem %s3, %s513
        %p515 = scmp.lt.s32.totalorder %s36, 4
        %s516 = scalar_select %p515, %s36, 4
        %s517 = scalar_lea.vmem %s5, %s516
        %p518 = scmp.lt.s32.totalorder %s36, 4
        %s519 = scalar_select %p518, %s36, 4
        %s520 = scalar_lea.vmem %s6, %s519
        %p521 = scmp.lt.s32.totalorder %s36, 4
        %s522 = scalar_select %p521, %s36, 4
        %s523 = scalar_lea.vmem %s7, %s522
        %s524 = smul.u32 32, %s37
        %p526 = scmp.lt.s32.totalorder %s36, 0
        %s527 = ssub.s32 0, %s36
        %s528 = scalar_select %p526, %s527, %s36
        %s529 = sand.u32 %s528, 1
        %s530 = ssub.s32 0, %s529
        %s531 = scalar_select %p526, %s530, %s529
        %p532 = scmp.ne.s32.totalorder %s531, 0
        %p533 = scmp.lt.s32.totalorder %s531, 0
        %p534 = pnand %p533, %p532
        %p535 = pneg %p534
        %s536 = sadd.s32 %s531, 2
        %s537 = scalar_select %p535, %s536, %s531
        %s538 = smul.u32 %s537, 512
        %s539 = sadd.s32 %s36, 1
        %p540 = scmp.lt.s32.totalorder %s539, 0
        %s541 = ssub.s32 0, %s539
        %s542 = scalar_select %p540, %s541, %s539
        %s543 = sand.u32 %s542, 1
        %s544 = ssub.s32 0, %s543
        %s545 = scalar_select %p540, %s544, %s543
        %p546 = scmp.ne.s32.totalorder %s545, 0
        %p547 = scmp.lt.s32.totalorder %s545, 0
        %p548 = pnand %p547, %p546
        %p549 = pneg %p548
        %s550 = sadd.s32 %s545, 2
        %s551 = scalar_select %p549, %s550, %s545
        %s552 = smul.u32 %s551, 512
        %p553 = scmp.eq.s32.totalorder %s36, 0
        %p554 = scmp.eq.s32.totalorder %s37, 0
        %p555 = pnand %p553, %p554
        %p556 = pneg %p555
        // Predicated region
        $region69: #{tpu_custom_call.1} parent=51 // pred_check
          _
        $region70: #{tpu_custom_call.1} parent=51 // pred_check_branch
          %558 = sbr.rel (%p555) target = $region72
        $region71: #{tpu_custom_call.1} parent=51 // pred_region
          %v559 = vld [vmem:[%s431] sm:$0xf]
          %v560 = vld [vmem:[%s431 + $0x4] sm:$0xf]
          %v561 = vld [vmem:[%s431 + $0x8] sm:$0xf]
          %v562 = vld [vmem:[%s431 + $0xc] sm:$0xf]
          %v563 = vld [vmem:[%s431 + $0x10] sm:$0xf]
          %v564 = vld [vmem:[%s431 + $0x14] sm:$0xf]
          %v565 = vld [vmem:[%s431 + $0x18] sm:$0xf]
          %v566 = vld [vmem:[%s431 + $0x1c] sm:$0xf]
          %v567 = vld [vmem:[%s431 + $0x20] sm:$0xf]
          %v568 = vld [vmem:[%s431 + $0x24] sm:$0xf]
          %v569 = vld [vmem:[%s431 + $0x28] sm:$0xf]
          %v570 = vld [vmem:[%s431 + $0x2c] sm:$0xf]
          %v571 = vld [vmem:[%s431 + $0x30] sm:$0xf]
          %v572 = vld [vmem:[%s431 + $0x34] sm:$0xf]
          %v573 = vld [vmem:[%s431 + $0x38] sm:$0xf]
          %v574 = vld [vmem:[%s431 + $0x3c] sm:$0xf]
          %v575 = vld [vmem:[%s431 + $0x40] sm:$0xf]
          %v576 = vld [vmem:[%s431 + $0x44] sm:$0xf]
          %v577 = vld [vmem:[%s431 + $0x48] sm:$0xf]
          %v578 = vld [vmem:[%s431 + $0x4c] sm:$0xf]
          %v579 = vld [vmem:[%s431 + $0x50] sm:$0xf]
          %v580 = vld [vmem:[%s431 + $0x54] sm:$0xf]
          %v581 = vld [vmem:[%s431 + $0x58] sm:$0xf]
          %v582 = vld [vmem:[%s431 + $0x5c] sm:$0xf]
          %v583 = vld [vmem:[%s431 + $0x60] sm:$0xf]
          %v584 = vld [vmem:[%s431 + $0x64] sm:$0xf]
          %v585 = vld [vmem:[%s431 + $0x68] sm:$0xf]
          %v586 = vld [vmem:[%s431 + $0x6c] sm:$0xf]
          %v587 = vld [vmem:[%s431 + $0x70] sm:$0xf]
          %v588 = vld [vmem:[%s431 + $0x74] sm:$0xf]
          %v589 = vld [vmem:[%s431 + $0x78] sm:$0xf]
          %v590 = vld [vmem:[%s431 + $0x7c] sm:$0xf]
          %s591 = smul.u32 %s38, 256
          %v624 = vunpack.c.l.b16 %v559
          %v625 = vunpack.c.l.b16 %v560
          %v626 = vunpack.c.l.b16 %v561
          %v627 = vunpack.c.l.b16 %v562
          %v628 = vunpack.c.l.b16 %v563
          %v629 = vunpack.c.l.b16 %v564
          %v630 = vunpack.c.l.b16 %v565
          %v631 = vunpack.c.l.b16 %v566
          %v632 = vunpack.c.l.b16 %v567
          %v633 = vunpack.c.l.b16 %v568
          %v634 = vunpack.c.l.b16 %v569
          %v635 = vunpack.c.l.b16 %v570
          %v636 = vunpack.c.l.b16 %v571
          %v637 = vunpack.c.l.b16 %v572
          %v638 = vunpack.c.l.b16 %v573
          %v639 = vunpack.c.l.b16 %v574
          %v640 = vunpack.c.l.b16 %v575
          %v641 = vunpack.c.l.b16 %v576
          %v642 = vunpack.c.l.b16 %v577
          %v643 = vunpack.c.l.b16 %v578
          %v644 = vunpack.c.l.b16 %v579
          %v645 = vunpack.c.l.b16 %v580
          %v646 = vunpack.c.l.b16 %v581
          %v647 = vunpack.c.l.b16 %v582
          %v648 = vunpack.c.l.b16 %v583
          %v649 = vunpack.c.l.b16 %v584
          %v650 = vunpack.c.l.b16 %v585
          %v651 = vunpack.c.l.b16 %v586
          %v652 = vunpack.c.l.b16 %v587
          %v653 = vunpack.c.l.b16 %v588
          %v654 = vunpack.c.l.b16 %v589
          %v655 = vunpack.c.l.b16 %v590
          %v656 = vpack.c.b16 %v625, %v624
          %v657 = vpack.c.b16 %v627, %v626
          %v658 = vpack.c.b16 %v629, %v628
          %v659 = vpack.c.b16 %v631, %v630
          %v660 = vpack.c.b16 %v633, %v632
          %v661 = vpack.c.b16 %v635, %v634
          %v662 = vpack.c.b16 %v637, %v636
          %v663 = vpack.c.b16 %v639, %v638
          %v664 = vpack.c.b16 %v641, %v640
          %v665 = vpack.c.b16 %v643, %v642
          %v666 = vpack.c.b16 %v645, %v644
          %v667 = vpack.c.b16 %v647, %v646
          %v668 = vpack.c.b16 %v649, %v648
          %v669 = vpack.c.b16 %v651, %v650
          %v670 = vpack.c.b16 %v653, %v652
          %v671 = vpack.c.b16 %v655, %v654
          %s688 = sshra.s32 %s591, 4
          %s689 = sand.u32 %s591, 15
          %s690 = smul.addr %s688, 8
          %s691 = scalar_lea.vmem [#allocation3], %s690
          %692 = vst [vmem:[%s691] sm:$0xff] %v656
          %693 = vst [vmem:[%s691 + $0x8] sm:$0xff] %v657
          %694 = vst [vmem:[%s691 + $0x10] sm:$0xff] %v658
          %695 = vst [vmem:[%s691 + $0x18] sm:$0xff] %v659
          %696 = vst [vmem:[%s691 + $0x20] sm:$0xff] %v660
          %697 = vst [vmem:[%s691 + $0x28] sm:$0xff] %v661
          %698 = vst [vmem:[%s691 + $0x30] sm:$0xff] %v662
          %699 = vst [vmem:[%s691 + $0x38] sm:$0xff] %v663
          %700 = vst [vmem:[%s691 + $0x40] sm:$0xff] %v664
          %701 = vst [vmem:[%s691 + $0x48] sm:$0xff] %v665
          %702 = vst [vmem:[%s691 + $0x50] sm:$0xff] %v666
          %703 = vst [vmem:[%s691 + $0x58] sm:$0xff] %v667
          %704 = vst [vmem:[%s691 + $0x60] sm:$0xff] %v668
          %705 = vst [vmem:[%s691 + $0x68] sm:$0xff] %v669
          %706 = vst [vmem:[%s691 + $0x70] sm:$0xff] %v670
          %707 = vst [vmem:[%s691 + $0x78] sm:$0xff] %v671
        $region72: #{tpu_custom_call.1} parent=51 // pred_fallthru
          _
        %p708 = scmp.eq.s32.totalorder %s38, 0
        // Predicated region
        $region73: #{tpu_custom_call.1} parent=51 // pred_check
          %p709 = pneg %p708
        $region74: #{tpu_custom_call.1} parent=51 // pred_check_branch
          %711 = sbr.rel (%p709) target = $region76
        $region75: #{tpu_custom_call.1} parent=51 // pred_region
          %712 = vst [vmem:[#allocation2] sm:$0xff] 0.0
          %713 = vst [vmem:[#allocation2 + $0x8] sm:$0xff] 0.0
          %714 = vst [vmem:[#allocation2 + $0x10] sm:$0xff] 0.0
          %715 = vst [vmem:[#allocation2 + $0x18] sm:$0xff] 0.0
          %716 = vst [vmem:[#allocation2 + $0x20] sm:$0xff] 0.0
          %717 = vst [vmem:[#allocation2 + $0x28] sm:$0xff] 0.0
          %718 = vst [vmem:[#allocation2 + $0x30] sm:$0xff] 0.0
          %719 = vst [vmem:[#allocation2 + $0x38] sm:$0xff] 0.0
          %720 = vst [vmem:[#allocation2 + $0x40] sm:$0xff] 0.0
          %721 = vst [vmem:[#allocation2 + $0x48] sm:$0xff] 0.0
          %722 = vst [vmem:[#allocation2 + $0x50] sm:$0xff] 0.0
          %723 = vst [vmem:[#allocation2 + $0x58] sm:$0xff] 0.0
          %724 = vst [vmem:[#allocation2 + $0x60] sm:$0xff] 0.0
          %725 = vst [vmem:[#allocation2 + $0x68] sm:$0xff] 0.0
          %726 = vst [vmem:[#allocation2 + $0x70] sm:$0xff] 0.0
          %727 = vst [vmem:[#allocation2 + $0x78] sm:$0xff] 0.0
          %728 = vst [vmem:[#allocation2 + $0x80] sm:$0xff] 0.0
          %729 = vst [vmem:[#allocation2 + $0x88] sm:$0xff] 0.0
          %730 = vst [vmem:[#allocation2 + $0x90] sm:$0xff] 0.0
          %731 = vst [vmem:[#allocation2 + $0x98] sm:$0xff] 0.0
          %732 = vst [vmem:[#allocation2 + $0xa0] sm:$0xff] 0.0
          %733 = vst [vmem:[#allocation2 + $0xa8] sm:$0xff] 0.0
          %734 = vst [vmem:[#allocation2 + $0xb0] sm:$0xff] 0.0
          %735 = vst [vmem:[#allocation2 + $0xb8] sm:$0xff] 0.0
          %736 = vst [vmem:[#allocation2 + $0xc0] sm:$0xff] 0.0
          %737 = vst [vmem:[#allocation2 + $0xc8] sm:$0xff] 0.0
          %738 = vst [vmem:[#allocation2 + $0xd0] sm:$0xff] 0.0
          %739 = vst [vmem:[#allocation2 + $0xd8] sm:$0xff] 0.0
          %740 = vst [vmem:[#allocation2 + $0xe0] sm:$0xff] 0.0
          %741 = vst [vmem:[#allocation2 + $0xe8] sm:$0xff] 0.0
          %742 = vst [vmem:[#allocation2 + $0xf0] sm:$0xff] 0.0
          %743 = vst [vmem:[#allocation2 + $0xf8] sm:$0xff] 0.0
        $region76: #{tpu_custom_call.1} parent=51 // pred_fallthru
          _
        %s744 = smul.u32 %s38, 256
        %s745 = sadd.s32 %s538, %s744
        %s746 = sshra.s32 %s745, 4
        %s747 = sand.u32 %s745, 15
        %s748 = smul.addr %s746, 8
        %s749 = scalar_lea.vmem [#allocation3], %s748
        %v750 = vld [vmem:[%s749] sm:$0xff]
        %v751 = vld [vmem:[%s749 + $0x8] sm:$0xff]
        %v752 = vld [vmem:[%s749 + $0x10] sm:$0xff]
        %v753 = vld [vmem:[%s749 + $0x18] sm:$0xff]
        %v754 = vld [vmem:[%s749 + $0x20] sm:$0xff]
        %v755 = vld [vmem:[%s749 + $0x28] sm:$0xff]
        %v756 = vld [vmem:[%s749 + $0x30] sm:$0xff]
        %v757 = vld [vmem:[%s749 + $0x38] sm:$0xff]
        %v758 = vld [vmem:[%s749 + $0x40] sm:$0xff]
        %v759 = vld [vmem:[%s749 + $0x48] sm:$0xff]
        %v760 = vld [vmem:[%s749 + $0x50] sm:$0xff]
        %v761 = vld [vmem:[%s749 + $0x58] sm:$0xff]
        %v762 = vld [vmem:[%s749 + $0x60] sm:$0xff]
        %v763 = vld [vmem:[%s749 + $0x68] sm:$0xff]
        %v764 = vld [vmem:[%s749 + $0x70] sm:$0xff]
        %v765 = vld [vmem:[%s749 + $0x78] sm:$0xff]
        %v766 = vld [vmem:[#allocation2] sm:$0xff]
        %v767 = vld [vmem:[#allocation2 + $0x8] sm:$0xff]
        %v768 = vld [vmem:[#allocation2 + $0x10] sm:$0xff]
        %v769 = vld [vmem:[#allocation2 + $0x18] sm:$0xff]
        %v770 = vld [vmem:[#allocation2 + $0x20] sm:$0xff]
        %v771 = vld [vmem:[#allocation2 + $0x28] sm:$0xff]
        %v772 = vld [vmem:[#allocation2 + $0x30] sm:$0xff]
        %v773 = vld [vmem:[#allocation2 + $0x38] sm:$0xff]
        %v774 = vld [vmem:[#allocation2 + $0x40] sm:$0xff]
        %v775 = vld [vmem:[#allocation2 + $0x48] sm:$0xff]
        %v776 = vld [vmem:[#allocation2 + $0x50] sm:$0xff]
        %v777 = vld [vmem:[#allocation2 + $0x58] sm:$0xff]
        %v778 = vld [vmem:[#allocation2 + $0x60] sm:$0xff]
        %v779 = vld [vmem:[#allocation2 + $0x68] sm:$0xff]
        %v780 = vld [vmem:[#allocation2 + $0x70] sm:$0xff]
        %v781 = vld [vmem:[#allocation2 + $0x78] sm:$0xff]
        %v782 = vld [vmem:[#allocation2 + $0x80] sm:$0xff]
        %v783 = vld [vmem:[#allocation2 + $0x88] sm:$0xff]
        %v784 = vld [vmem:[#allocation2 + $0x90] sm:$0xff]
        %v785 = vld [vmem:[#allocation2 + $0x98] sm:$0xff]
        %v786 = vld [vmem:[#allocation2 + $0xa0] sm:$0xff]
        %v787 = vld [vmem:[#allocation2 + $0xa8] sm:$0xff]
        %v788 = vld [vmem:[#allocation2 + $0xb0] sm:$0xff]
        %v789 = vld [vmem:[#allocation2 + $0xb8] sm:$0xff]
        %v790 = vld [vmem:[#allocation2 + $0xc0] sm:$0xff]
        %v791 = vld [vmem:[#allocation2 + $0xc8] sm:$0xff]
        %v792 = vld [vmem:[#allocation2 + $0xd0] sm:$0xff]
        %v793 = vld [vmem:[#allocation2 + $0xd8] sm:$0xff]
        %v794 = vld [vmem:[#allocation2 + $0xe0] sm:$0xff]
        %v795 = vld [vmem:[#allocation2 + $0xe8] sm:$0xff]
        %v796 = vld [vmem:[#allocation2 + $0xf0] sm:$0xff]
        %v797 = vld [vmem:[#allocation2 + $0xf8] sm:$0xff]
        %v798 = vld [vmem:[%s422] sm:$0xff]
        %v799 = vld [vmem:[%s422 + $0x8] sm:$0xff]
        %v800 = vld [vmem:[%s422 + $0x10] sm:$0xff]
        %v801 = vld [vmem:[%s422 + $0x18] sm:$0xff]
        %v802 = vld [vmem:[%s422 + $0x20] sm:$0xff]
        %v803 = vld [vmem:[%s422 + $0x28] sm:$0xff]
        %v804 = vld [vmem:[%s422 + $0x30] sm:$0xff]
        %v805 = vld [vmem:[%s422 + $0x38] sm:$0xff]
        %v806 = vld [vmem:[%s422 + $0x40] sm:$0xff]
        %v807 = vld [vmem:[%s422 + $0x48] sm:$0xff]
        %v808 = vld [vmem:[%s422 + $0x50] sm:$0xff]
        %v809 = vld [vmem:[%s422 + $0x58] sm:$0xff]
        %v810 = vld [vmem:[%s422 + $0x60] sm:$0xff]
        %v811 = vld [vmem:[%s422 + $0x68] sm:$0xff]
        %v812 = vld [vmem:[%s422 + $0x70] sm:$0xff]
        %v813 = vld [vmem:[%s422 + $0x78] sm:$0xff]
        %v814 = vld [vmem:[%s422 + $0x80] sm:$0xff]
        %v815 = vld [vmem:[%s422 + $0x88] sm:$0xff]
        %v816 = vld [vmem:[%s422 + $0x90] sm:$0xff]
        %v817 = vld [vmem:[%s422 + $0x98] sm:$0xff]
        %v818 = vld [vmem:[%s422 + $0xa0] sm:$0xff]
        %v819 = vld [vmem:[%s422 + $0xa8] sm:$0xff]
        %v820 = vld [vmem:[%s422 + $0xb0] sm:$0xff]
        %v821 = vld [vmem:[%s422 + $0xb8] sm:$0xff]
        %v822 = vld [vmem:[%s422 + $0xc0] sm:$0xff]
        %v823 = vld [vmem:[%s422 + $0xc8] sm:$0xff]
        %v824 = vld [vmem:[%s422 + $0xd0] sm:$0xff]
        %v825 = vld [vmem:[%s422 + $0xd8] sm:$0xff]
        %v826 = vld [vmem:[%s422 + $0xe0] sm:$0xff]
        %v827 = vld [vmem:[%s422 + $0xe8] sm:$0xff]
        %v828 = vld [vmem:[%s422 + $0xf0] sm:$0xff]
        %v829 = vld [vmem:[%s422 + $0xf8] sm:$0xff]
        %v862 = vunpack.c.l.b16 %v798
        %v863 = vunpack.c.h.b16 %v798
        %v864 = vunpack.c.l.b16 %v799
        %v865 = vunpack.c.h.b16 %v799
        %v866 = vunpack.c.l.b16 %v800
        %v867 = vunpack.c.h.b16 %v800
        %v868 = vunpack.c.l.b16 %v801
        %v869 = vunpack.c.h.b16 %v801
        %v870 = vunpack.c.l.b16 %v802
        %v871 = vunpack.c.h.b16 %v802
        %v872 = vunpack.c.l.b16 %v803
        %v873 = vunpack.c.h.b16 %v803
        %v874 = vunpack.c.l.b16 %v804
        %v875 = vunpack.c.h.b16 %v804
        %v876 = vunpack.c.l.b16 %v805
        %v877 = vunpack.c.h.b16 %v805
        %v878 = vunpack.c.l.b16 %v806
        %v879 = vunpack.c.h.b16 %v806
        %v880 = vunpack.c.l.b16 %v807
        %v881 = vunpack.c.h.b16 %v807
        %v882 = vunpack.c.l.b16 %v808
        %v883 = vunpack.c.h.b16 %v808
        %v884 = vunpack.c.l.b16 %v809
        %v885 = vunpack.c.h.b16 %v809
        %v886 = vunpack.c.l.b16 %v810
        %v887 = vunpack.c.h.b16 %v810
        %v888 = vunpack.c.l.b16 %v811
        %v889 = vunpack.c.h.b16 %v811
        %v890 = vunpack.c.l.b16 %v812
        %v891 = vunpack.c.h.b16 %v812
        %v892 = vunpack.c.l.b16 %v813
        %v893 = vunpack.c.h.b16 %v813
        %v894 = vunpack.c.l.b16 %v814
        %v895 = vunpack.c.h.b16 %v814
        %v896 = vunpack.c.l.b16 %v815
        %v897 = vunpack.c.h.b16 %v815
        %v898 = vunpack.c.l.b16 %v816
        %v899 = vunpack.c.h.b16 %v816
        %v900 = vunpack.c.l.b16 %v817
        %v901 = vunpack.c.h.b16 %v817
        %v902 = vunpack.c.l.b16 %v818
        %v903 = vunpack.c.h.b16 %v818
        %v904 = vunpack.c.l.b16 %v819
        %v905 = vunpack.c.h.b16 %v819
        %v906 = vunpack.c.l.b16 %v820
        %v907 = vunpack.c.h.b16 %v820
        %v908 = vunpack.c.l.b16 %v821
        %v909 = vunpack.c.h.b16 %v821
        %v910 = vunpack.c.l.b16 %v822
        %v911 = vunpack.c.h.b16 %v822
        %v912 = vunpack.c.l.b16 %v823
        %v913 = vunpack.c.h.b16 %v823
        %v914 = vunpack.c.l.b16 %v824
        %v915 = vunpack.c.h.b16 %v824
        %v916 = vunpack.c.l.b16 %v825
        %v917 = vunpack.c.h.b16 %v825
        %v918 = vunpack.c.l.b16 %v826
        %v919 = vunpack.c.h.b16 %v826
        %v920 = vunpack.c.l.b16 %v827
        %v921 = vunpack.c.h.b16 %v827
        %v922 = vunpack.c.l.b16 %v828
        %v923 = vunpack.c.h.b16 %v828
        %v924 = vunpack.c.l.b16 %v829
        %v925 = vunpack.c.h.b16 %v829
        %v926 = vpack.c.b16 %v864, %v862
        %v927 = vpack.c.b16 %v865, %v863
        %v928 = vpack.c.b16 %v868, %v866
        %v929 = vpack.c.b16 %v869, %v867
        %v930 = vpack.c.b16 %v872, %v870
        %v931 = vpack.c.b16 %v873, %v871
        %v932 = vpack.c.b16 %v876, %v874
        %v933 = vpack.c.b16 %v877, %v875
        %v934 = vpack.c.b16 %v880, %v878
        %v935 = vpack.c.b16 %v881, %v879
        %v936 = vpack.c.b16 %v884, %v882
        %v937 = vpack.c.b16 %v885, %v883
        %v938 = vpack.c.b16 %v888, %v886
        %v939 = vpack.c.b16 %v889, %v887
        %v940 = vpack.c.b16 %v892, %v890
        %v941 = vpack.c.b16 %v893, %v891
        %v942 = vpack.c.b16 %v896, %v894
        %v943 = vpack.c.b16 %v897, %v895
        %v944 = vpack.c.b16 %v900, %v898
        %v945 = vpack.c.b16 %v901, %v899
        %v946 = vpack.c.b16 %v904, %v902
        %v947 = vpack.c.b16 %v905, %v903
        %v948 = vpack.c.b16 %v908, %v906
        %v949 = vpack.c.b16 %v909, %v907
        %v950 = vpack.c.b16 %v912, %v910
        %v951 = vpack.c.b16 %v913, %v911
        %v952 = vpack.c.b16 %v916, %v914
        %v953 = vpack.c.b16 %v917, %v915
        %v954 = vpack.c.b16 %v920, %v918
        %v955 = vpack.c.b16 %v921, %v919
        %v956 = vpack.c.b16 %v924, %v922
        %v957 = vpack.c.b16 %v925, %v923
        %990 = vmatprep.subr.bf16.mxu0 0
        %991 = vmatpush1.bf16.msra.mxu0 %v750
        %992 = vmatprep.subr.bf16.mxu0 0
        %993 = vmatpush1.bf16.msra.mxu0 %v751
        %994 = vmatprep.subr.bf16.mxu0 0
        %995 = vmatpush1.bf16.msra.mxu0 %v752
        %996 = vmatprep.subr.bf16.mxu0 0
        %997 = vmatpush1.bf16.msra.mxu0 %v753
        %998 = vmatprep.subr.bf16.mxu0 0
        %999 = vmatpush1.bf16.msra.mxu0 %v754
        %1000 = vmatprep.subr.bf16.mxu0 0
        %1001 = vmatpush1.bf16.msra.mxu0 %v755
        %1002 = vmatprep.subr.bf16.mxu0 0
        %1003 = vmatpush1.bf16.msra.mxu0 %v756
        %1004 = vmatprep.subr.bf16.mxu0 0
        %1005 = vmatpush1.bf16.msra.mxu0 %v757
        %1006 = vmatprep.subr.bf16.mxu0 0
        %1007 = vmatpush1.bf16.msra.mxu0 %v758
        %1008 = vmatprep.subr.bf16.mxu0 0
        %1009 = vmatpush1.bf16.msra.mxu0 %v759
        %1010 = vmatprep.subr.bf16.mxu0 0
        %1011 = vmatpush1.bf16.msra.mxu0 %v760
        %1012 = vmatprep.subr.bf16.mxu0 0
        %1013 = vmatpush1.bf16.msra.mxu0 %v761
        %1014 = vmatprep.subr.bf16.mxu0 0
        %1015 = vmatpush1.bf16.msra.mxu0 %v762
        %1016 = vmatprep.subr.bf16.mxu0 0
        %1017 = vmatpush1.bf16.msra.mxu0 %v763
        %1018 = vmatprep.subr.bf16.mxu0 0
        %1019 = vmatpush1.bf16.msra.mxu0 %v764
        %1020 = vmatprep.subr.bf16.mxu0 0
        %1021 = vmatpush1.bf16.msra.mxu0 %v765
        %1022 = vmatprep.mubr.bf16.mxu0 %v927
        %1023 = vmatmul.mubr.bf16.gmra.mrb[0].mxu0 %v926
        %v1024 = vpop.f32.mrb[0].mxu0
        %v1025 = vadd.f32 0.0, %v1024
        %v1026 = vpop.f32.mrb[0].mxu0
        %v1027 = vpop.f32.mrb[0].mxu0
        %v1028 = vadd.f32 0.0, %v1027
        %v1029 = vpop.f32.mrb[0].mxu0
        %1030 = vmatprep.mubr.bf16.mxu0 %v929
        %1031 = vmatmul.mubr.bf16.gmra.mrb[0].mxu0 %v928
        %v1032 = vpop.f32.mrb[0].mxu0
        %v1033 = vadd.f32 0.0, %v1032
        %v1034 = vpop.f32.mrb[0].mxu0
        %v1035 = vpop.f32.mrb[0].mxu0
        %v1036 = vadd.f32 0.0, %v1035
        %v1037 = vpop.f32.mrb[0].mxu0
        %1038 = vmatprep.mubr.bf16.mxu0 %v931
        %1039 = vmatmul.mubr.bf16.gmra.mrb[0].mxu0 %v930
        %v1040 = vpop.f32.mrb[0].mxu0
        %v1041 = vadd.f32 0.0, %v1040
        %v1042 = vpop.f32.mrb[0].mxu0
        %v1043 = vpop.f32.mrb[0].mxu0
        %v1044 = vadd.f32 0.0, %v1043
        %v1045 = vpop.f32.mrb[0].mxu0
        %1046 = vmatprep.mubr.bf16.mxu0 %v933
        %1047 = vmatmul.mubr.bf16.gmra.mrb[0].mxu0 %v932
        %v1048 = vpop.f32.mrb[0].mxu0
        %v1049 = vadd.f32 0.0, %v1048
        %v1050 = vpop.f32.mrb[0].mxu0
        %v1051 = vpop.f32.mrb[0].mxu0
        %v1052 = vadd.f32 0.0, %v1051
        %v1053 = vpop.f32.mrb[0].mxu0
        %1054 = vmatprep.mubr.bf16.mxu0 %v935
        %1055 = vmatmul.mubr.bf16.gmra.mrb[0].mxu0 %v934
        %v1056 = vpop.f32.mrb[0].mxu0
        %v1057 = vadd.f32 0.0, %v1056
        %v1058 = vpop.f32.mrb[0].mxu0
        %v1059 = vpop.f32.mrb[0].mxu0
        %v1060 = vadd.f32 0.0, %v1059
        %v1061 = vpop.f32.mrb[0].mxu0
        %1062 = vmatprep.mubr.bf16.mxu0 %v937
        %1063 = vmatmul.mubr.bf16.gmra.mrb[0].mxu0 %v936
        %v1064 = vpop.f32.mrb[0].mxu0
        %v1065 = vadd.f32 0.0, %v1064
        %v1066 = vpop.f32.mrb[0].mxu0
        %v1067 = vpop.f32.mrb[0].mxu0
        %v1068 = vadd.f32 0.0, %v1067
        %v1069 = vpop.f32.mrb[0].mxu0
        %1070 = vmatprep.mubr.bf16.mxu0 %v939
        %1071 = vmatmul.mubr.bf16.gmra.mrb[0].mxu0 %v938
        %v1072 = vpop.f32.mrb[0].mxu0
        %v1073 = vadd.f32 0.0, %v1072
        %v1074 = vpop.f32.mrb[0].mxu0
        %v1075 = vpop.f32.mrb[0].mxu0
        %v1076 = vadd.f32 0.0, %v1075
        %v1077 = vpop.f32.mrb[0].mxu0
        %1078 = vmatprep.mubr.bf16.mxu0 %v941
        %1079 = vmatmul.mubr.bf16.gmra.mrb[0].mxu0 %v940
        %v1080 = vpop.f32.mrb[0].mxu0
        %v1081 = vadd.f32 0.0, %v1080
        %v1082 = vpop.f32.mrb[0].mxu0
        %v1083 = vpop.f32.mrb[0].mxu0
        %v1084 = vadd.f32 0.0, %v1083
        %v1085 = vpop.f32.mrb[0].mxu0
        %1086 = vmatprep.mubr.bf16.mxu0 %v943
        %1087 = vmatmul.mubr.bf16.gmra.mrb[0].mxu0 %v942
        %v1088 = vpop.f32.mrb[0].mxu0
        %v1089 = vadd.f32 0.0, %v1088
        %v1090 = vpop.f32.mrb[0].mxu0
        %v1091 = vpop.f32.mrb[0].mxu0
        %v1092 = vadd.f32 0.0, %v1091
        %v1093 = vpop.f32.mrb[0].mxu0
        %1094 = vmatprep.mubr.bf16.mxu0 %v945
        %1095 = vmatmul.mubr.bf16.gmra.mrb[0].mxu0 %v944
        %v1096 = vpop.f32.mrb[0].mxu0
        %v1097 = vadd.f32 0.0, %v1096
        %v1098 = vpop.f32.mrb[0].mxu0
        %v1099 = vpop.f32.mrb[0].mxu0
        %v1100 = vadd.f32 0.0, %v1099
        %v1101 = vpop.f32.mrb[0].mxu0
        %1102 = vmatprep.mubr.bf16.mxu0 %v947
        %1103 = vmatmul.mubr.bf16.gmra.mrb[0].mxu0 %v946
        %v1104 = vpop.f32.mrb[0].mxu0
        %v1105 = vadd.f32 0.0, %v1104
        %v1106 = vpop.f32.mrb[0].mxu0
        %v1107 = vpop.f32.mrb[0].mxu0
        %v1108 = vadd.f32 0.0, %v1107
        %v1109 = vpop.f32.mrb[0].mxu0
        %1110 = vmatprep.mubr.bf16.mxu0 %v949
        %1111 = vmatmul.mubr.bf16.gmra.mrb[0].mxu0 %v948
        %v1112 = vpop.f32.mrb[0].mxu0
        %v1113 = vadd.f32 0.0, %v1112
        %v1114 = vpop.f32.mrb[0].mxu0
        %v1115 = vpop.f32.mrb[0].mxu0
        %v1116 = vadd.f32 0.0, %v1115
        %v1117 = vpop.f32.mrb[0].mxu0
        %1118 = vmatprep.mubr.bf16.mxu0 %v951
        %1119 = vmatmul.mubr.bf16.gmra.mrb[0].mxu0 %v950
        %v1120 = vpop.f32.mrb[0].mxu0
        %v1121 = vadd.f32 0.0, %v1120
        %v1122 = vpop.f32.mrb[0].mxu0
        %v1123 = vpop.f32.mrb[0].mxu0
        %v1124 = vadd.f32 0.0, %v1123
        %v1125 = vpop.f32.mrb[0].mxu0
        %1126 = vmatprep.mubr.bf16.mxu0 %v953
        %1127 = vmatmul.mubr.bf16.gmra.mrb[0].mxu0 %v952
        %v1128 = vpop.f32.mrb[0].mxu0
        %v1129 = vadd.f32 0.0, %v1128
        %v1130 = vpop.f32.mrb[0].mxu0
        %v1131 = vpop.f32.mrb[0].mxu0
        %v1132 = vadd.f32 0.0, %v1131
        %v1133 = vpop.f32.mrb[0].mxu0
        %1134 = vmatprep.mubr.bf16.mxu0 %v955
        %1135 = vmatmul.mubr.bf16.gmra.mrb[0].mxu0 %v954
        %v1136 = vpop.f32.mrb[0].mxu0
        %v1137 = vadd.f32 0.0, %v1136
        %v1138 = vpop.f32.mrb[0].mxu0
        %v1139 = vpop.f32.mrb[0].mxu0
        %v1140 = vadd.f32 0.0, %v1139
        %v1141 = vpop.f32.mrb[0].mxu0
        %1142 = vmatprep.mubr.bf16.mxu0 %v957
        %1143 = vmatmul.mubr.bf16.gmra.mrb[0].mxu0 %v956
        %v1144 = vpop.f32.mrb[0].mxu0
        %v1145 = vadd.f32 0.0, %v1144
        %v1146 = vpop.f32.mrb[0].mxu0
        %v1147 = vpop.f32.mrb[0].mxu0
        %v1148 = vadd.f32 0.0, %v1147
        %v1149 = vpop.f32.mrb[0].mxu0
        %1150 = vdwg.mxu0
        %v1151 = vadd.f32 %v766, %v1025
        %v1152 = vadd.f32 %v767, %v1028
        %v1153 = vadd.f32 %v768, %v1033
        %v1154 = vadd.f32 %v769, %v1036
        %v1155 = vadd.f32 %v770, %v1041
        %v1156 = vadd.f32 %v771, %v1044
        %v1157 = vadd.f32 %v772, %v1049
        %v1158 = vadd.f32 %v773, %v1052
        %v1159 = vadd.f32 %v774, %v1057
        %v1160 = vadd.f32 %v775, %v1060
        %v1161 = vadd.f32 %v776, %v1065
        %v1162 = vadd.f32 %v777, %v1068
        %v1163 = vadd.f32 %v778, %v1073
        %v1164 = vadd.f32 %v779, %v1076
        %v1165 = vadd.f32 %v780, %v1081
        %v1166 = vadd.f32 %v781, %v1084
        %v1167 = vadd.f32 %v782, %v1089
        %v1168 = vadd.f32 %v783, %v1092
        %v1169 = vadd.f32 %v784, %v1097
        %v1170 = vadd.f32 %v785, %v1100
        %v1171 = vadd.f32 %v786, %v1105
        %v1172 = vadd.f32 %v787, %v1108
        %v1173 = vadd.f32 %v788, %v1113
        %v1174 = vadd.f32 %v789, %v1116
        %v1175 = vadd.f32 %v790, %v1121
        %v1176 = vadd.f32 %v791, %v1124
        %v1177 = vadd.f32 %v792, %v1129
        %v1178 = vadd.f32 %v793, %v1132
        %v1179 = vadd.f32 %v794, %v1137
        %v1180 = vadd.f32 %v795, %v1140
        %v1181 = vadd.f32 %v796, %v1145
        %v1182 = vadd.f32 %v797, %v1148
        %1183 = vst [vmem:[#allocation2] sm:$0xff] %v1151
        %1184 = vst [vmem:[#allocation2 + $0x8] sm:$0xff] %v1152
        %1185 = vst [vmem:[#allocation2 + $0x10] sm:$0xff] %v1153
        %1186 = vst [vmem:[#allocation2 + $0x18] sm:$0xff] %v1154
        %1187 = vst [vmem:[#allocation2 + $0x20] sm:$0xff] %v1155
        %1188 = vst [vmem:[#allocation2 + $0x28] sm:$0xff] %v1156
        %1189 = vst [vmem:[#allocation2 + $0x30] sm:$0xff] %v1157
        %1190 = vst [vmem:[#allocation2 + $0x38] sm:$0xff] %v1158
        %1191 = vst [vmem:[#allocation2 + $0x40] sm:$0xff] %v1159
        %1192 = vst [vmem:[#allocation2 + $0x48] sm:$0xff] %v1160
        %1193 = vst [vmem:[#allocation2 + $0x50] sm:$0xff] %v1161
        %1194 = vst [vmem:[#allocation2 + $0x58] sm:$0xff] %v1162
        %1195 = vst [vmem:[#allocation2 + $0x60] sm:$0xff] %v1163
        %1196 = vst [vmem:[#allocation2 + $0x68] sm:$0xff] %v1164
        %1197 = vst [vmem:[#allocation2 + $0x70] sm:$0xff] %v1165
        %1198 = vst [vmem:[#allocation2 + $0x78] sm:$0xff] %v1166
        %1199 = vst [vmem:[#allocation2 + $0x80] sm:$0xff] %v1167
        %1200 = vst [vmem:[#allocation2 + $0x88] sm:$0xff] %v1168
        %1201 = vst [vmem:[#allocation2 + $0x90] sm:$0xff] %v1169
        %1202 = vst [vmem:[#allocation2 + $0x98] sm:$0xff] %v1170
        %1203 = vst [vmem:[#allocation2 + $0xa0] sm:$0xff] %v1171
        %1204 = vst [vmem:[#allocation2 + $0xa8] sm:$0xff] %v1172
        %1205 = vst [vmem:[#allocation2 + $0xb0] sm:$0xff] %v1173
        %1206 = vst [vmem:[#allocation2 + $0xb8] sm:$0xff] %v1174
        %1207 = vst [vmem:[#allocation2 + $0xc0] sm:$0xff] %v1175
        %1208 = vst [vmem:[#allocation2 + $0xc8] sm:$0xff] %v1176
        %1209 = vst [vmem:[#allocation2 + $0xd0] sm:$0xff] %v1177
        %1210 = vst [vmem:[#allocation2 + $0xd8] sm:$0xff] %v1178
        %1211 = vst [vmem:[#allocation2 + $0xe0] sm:$0xff] %v1179
        %1212 = vst [vmem:[#allocation2 + $0xe8] sm:$0xff] %v1180
        %1213 = vst [vmem:[#allocation2 + $0xf0] sm:$0xff] %v1181
        %1214 = vst [vmem:[#allocation2 + $0xf8] sm:$0xff] %v1182
        %p1215 = scmp.eq.s32.totalorder %s38, 1
        // Predicated region
        $region77: #{tpu_custom_call.1} parent=51 // pred_check
          %p1216 = pneg %p1215
        $region78: #{tpu_custom_call.1} parent=51 // pred_check_branch
          %1218 = sbr.rel (%p1216) target = $region80
        $region79: #{tpu_custom_call.1} parent=51 // pred_region
          %v1219 = vld [vmem:[#allocation2] sm:$0xff]
          %v1220 = vld [vmem:[#allocation2 + $0x8] sm:$0xff]
          %v1221 = vld [vmem:[#allocation2 + $0x10] sm:$0xff]
          %v1222 = vld [vmem:[#allocation2 + $0x18] sm:$0xff]
          %v1223 = vld [vmem:[#allocation2 + $0x20] sm:$0xff]
          %v1224 = vld [vmem:[#allocation2 + $0x28] sm:$0xff]
          %v1225 = vld [vmem:[#allocation2 + $0x30] sm:$0xff]
          %v1226 = vld [vmem:[#allocation2 + $0x38] sm:$0xff]
          %v1227 = vld [vmem:[#allocation2 + $0x40] sm:$0xff]
          %v1228 = vld [vmem:[#allocation2 + $0x48] sm:$0xff]
          %v1229 = vld [vmem:[#allocation2 + $0x50] sm:$0xff]
          %v1230 = vld [vmem:[#allocation2 + $0x58] sm:$0xff]
          %v1231 = vld [vmem:[#allocation2 + $0x60] sm:$0xff]
          %v1232 = vld [vmem:[#allocation2 + $0x68] sm:$0xff]
          %v1233 = vld [vmem:[#allocation2 + $0x70] sm:$0xff]
          %v1234 = vld [vmem:[#allocation2 + $0x78] sm:$0xff]
          %v1235 = vld [vmem:[#allocation2 + $0x80] sm:$0xff]
          %v1236 = vld [vmem:[#allocation2 + $0x88] sm:$0xff]
          %v1237 = vld [vmem:[#allocation2 + $0x90] sm:$0xff]
          %v1238 = vld [vmem:[#allocation2 + $0x98] sm:$0xff]
          %v1239 = vld [vmem:[#allocation2 + $0xa0] sm:$0xff]
          %v1240 = vld [vmem:[#allocation2 + $0xa8] sm:$0xff]
          %v1241 = vld [vmem:[#allocation2 + $0xb0] sm:$0xff]
          %v1242 = vld [vmem:[#allocation2 + $0xb8] sm:$0xff]
          %v1243 = vld [vmem:[#allocation2 + $0xc0] sm:$0xff]
          %v1244 = vld [vmem:[#allocation2 + $0xc8] sm:$0xff]
          %v1245 = vld [vmem:[#allocation2 + $0xd0] sm:$0xff]
          %v1246 = vld [vmem:[#allocation2 + $0xd8] sm:$0xff]
          %v1247 = vld [vmem:[#allocation2 + $0xe0] sm:$0xff]
          %v1248 = vld [vmem:[#allocation2 + $0xe8] sm:$0xff]
          %v1249 = vld [vmem:[#allocation2 + $0xf0] sm:$0xff]
          %v1250 = vld [vmem:[#allocation2 + $0xf8] sm:$0xff]
          %v1251 = vpack.c.bf16 %v1220, %v1219
          %v1252 = vpack.c.bf16 %v1222, %v1221
          %v1253 = vpack.c.bf16 %v1224, %v1223
          %v1254 = vpack.c.bf16 %v1226, %v1225
          %v1255 = vpack.c.bf16 %v1228, %v1227
          %v1256 = vpack.c.bf16 %v1230, %v1229
          %v1257 = vpack.c.bf16 %v1232, %v1231
          %v1258 = vpack.c.bf16 %v1234, %v1233
          %v1259 = vpack.c.bf16 %v1236, %v1235
          %v1260 = vpack.c.bf16 %v1238, %v1237
          %v1261 = vpack.c.bf16 %v1240, %v1239
          %v1262 = vpack.c.bf16 %v1242, %v1241
          %v1263 = vpack.c.bf16 %v1244, %v1243
          %v1264 = vpack.c.bf16 %v1246, %v1245
          %v1265 = vpack.c.bf16 %v1248, %v1247
          %v1266 = vpack.c.bf16 %v1250, %v1249
          %v1267 = vld [vmem:[%s440] sm:$0xf]
          %v1268 = vld [vmem:[%s440 + $0x4] sm:$0xf]
          %v1269 = vld [vmem:[%s440 + $0x8] sm:$0xf]
          %v1270 = vld [vmem:[%s440 + $0xc] sm:$0xf]
          %v1271 = vld [vmem:[%s440 + $0x10] sm:$0xf]
          %v1272 = vld [vmem:[%s440 + $0x14] sm:$0xf]
          %v1273 = vld [vmem:[%s440 + $0x18] sm:$0xf]
          %v1274 = vld [vmem:[%s440 + $0x1c] sm:$0xf]
          %v1275 = vld [vmem:[%s440 + $0x20] sm:$0xf]
          %v1276 = vld [vmem:[%s440 + $0x24] sm:$0xf]
          %v1277 = vld [vmem:[%s440 + $0x28] sm:$0xf]
          %v1278 = vld [vmem:[%s440 + $0x2c] sm:$0xf]
          %v1279 = vld [vmem:[%s440 + $0x30] sm:$0xf]
          %v1280 = vld [vmem:[%s440 + $0x34] sm:$0xf]
          %v1281 = vld [vmem:[%s440 + $0x38] sm:$0xf]
          %v1282 = vld [vmem:[%s440 + $0x3c] sm:$0xf]
          %v1283 = vld [vmem:[%s514] sm:$0x1]
          %v1285 = vlaneseq
          %v1286 = vshrl.u32 %v1285, 7
          %v1287 = vsub.s32 0, %v1286
          %v1288 = vrot.slane %v1283, %v1287
          %v1306 = vunpack.c.l.b16 %v1267
          %v1307 = vunpack.c.l.b16 %v1268
          %v1308 = vunpack.c.l.b16 %v1269
          %v1309 = vunpack.c.l.b16 %v1270
          %v1310 = vunpack.c.l.b16 %v1271
          %v1311 = vunpack.c.l.b16 %v1272
          %v1312 = vunpack.c.l.b16 %v1273
          %v1313 = vunpack.c.l.b16 %v1274
          %v1314 = vunpack.c.l.b16 %v1275
          %v1315 = vunpack.c.l.b16 %v1276
          %v1316 = vunpack.c.l.b16 %v1277
          %v1317 = vunpack.c.l.b16 %v1278
          %v1318 = vunpack.c.l.b16 %v1279
          %v1319 = vunpack.c.l.b16 %v1280
          %v1320 = vunpack.c.l.b16 %v1281
          %v1321 = vunpack.c.l.b16 %v1282
          %v1322 = vpack.c.b16 %v1307, %v1306
          %v1323 = vpack.c.b16 %v1309, %v1308
          %v1324 = vpack.c.b16 %v1311, %v1310
          %v1325 = vpack.c.b16 %v1313, %v1312
          %v1326 = vpack.c.b16 %v1315, %v1314
          %v1327 = vpack.c.b16 %v1317, %v1316
          %v1328 = vpack.c.b16 %v1319, %v1318
          %v1329 = vpack.c.b16 %v1321, %v1320
          %1338 = vmatprep.subr.bf16.mxu0 0
          %1339 = vmatpush1.bf16.msra.mxu0 %v1322
          %1340 = vmatprep.subr.bf16.mxu0 0
          %1341 = vmatpush1.bf16.msra.mxu0 %v1323
          %1342 = vmatprep.subr.bf16.mxu0 0
          %1343 = vmatpush1.bf16.msra.mxu0 %v1324
          %1344 = vmatprep.subr.bf16.mxu0 0
          %1345 = vmatpush1.bf16.msra.mxu0 %v1325
          %1346 = vmatprep.subr.bf16.mxu0 0
          %1347 = vmatpush1.bf16.msra.mxu0 %v1326
          %1348 = vmatprep.subr.bf16.mxu0 0
          %1349 = vmatpush1.bf16.msra.mxu0 %v1327
          %1350 = vmatprep.subr.bf16.mxu0 0
          %1351 = vmatpush1.bf16.msra.mxu0 %v1328
          %1352 = vmatprep.subr.bf16.mxu0 0
          %1353 = vmatpush1.bf16.msra.mxu0 %v1329
          %1354 = vmatprep.subr.bf16.mxu0 0
          %1355 = vmatpush1.bf16.msra.mxu0 0
          %1356 = vmatprep.subr.bf16.mxu0 0
          %1357 = vmatpush1.bf16.msra.mxu0 0
          %1358 = vmatprep.subr.bf16.mxu0 0
          %1359 = vmatpush1.bf16.msra.mxu0 0
          %1360 = vmatprep.subr.bf16.mxu0 0
          %1361 = vmatpush1.bf16.msra.mxu0 0
          %1362 = vmatprep.subr.bf16.mxu0 0
          %1363 = vmatpush1.bf16.msra.mxu0 0
          %1364 = vmatprep.subr.bf16.mxu0 0
          %1365 = vmatpush1.bf16.msra.mxu0 0
          %1366 = vmatprep.subr.bf16.mxu0 0
          %1367 = vmatpush1.bf16.msra.mxu0 0
          %1368 = vmatprep.subr.bf16.mxu0 0
          %1369 = vmatpush1.bf16.msra.mxu0 0
          %1370 = vmatprep.mubr.bf16.mxu0 0
          %1371 = vmatmul.mubr.bf16.gmra.mrb[0].mxu0 %v1251
          %v1372 = vpop.f32.mrb[0].mxu0
          %v1373 = vadd.f32 %v1288, %v1372
          %v1374 = vpop.f32.mrb[0].mxu0
          %v1375 = vpop.f32.mrb[0].mxu0
          %v1376 = vadd.f32 %v1288, %v1375
          %v1377 = vpop.f32.mrb[0].mxu0
          %1378 = vmatprep.mubr.bf16.mxu0 0
          %1379 = vmatmul.mubr.bf16.gmra.mrb[0].mxu0 %v1252
          %v1380 = vpop.f32.mrb[0].mxu0
          %v1381 = vadd.f32 %v1288, %v1380
          %v1382 = vpop.f32.mrb[0].mxu0
          %v1383 = vpop.f32.mrb[0].mxu0
          %v1384 = vadd.f32 %v1288, %v1383
          %v1385 = vpop.f32.mrb[0].mxu0
          %1386 = vmatprep.mubr.bf16.mxu0 0
          %1387 = vmatmul.mubr.bf16.gmra.mrb[0].mxu0 %v1253
          %v1388 = vpop.f32.mrb[0].mxu0
          %v1389 = vadd.f32 %v1288, %v1388
          %v1390 = vpop.f32.mrb[0].mxu0
          %v1391 = vpop.f32.mrb[0].mxu0
          %v1392 = vadd.f32 %v1288, %v1391
          %v1393 = vpop.f32.mrb[0].mxu0
          %1394 = vmatprep.mubr.bf16.mxu0 0
          %1395 = vmatmul.mubr.bf16.gmra.mrb[0].mxu0 %v1254
          %v1396 = vpop.f32.mrb[0].mxu0
          %v1397 = vadd.f32 %v1288, %v1396
          %v1398 = vpop.f32.mrb[0].mxu0
          %v1399 = vpop.f32.mrb[0].mxu0
          %v1400 = vadd.f32 %v1288, %v1399
          %v1401 = vpop.f32.mrb[0].mxu0
          %1402 = vmatprep.mubr.bf16.mxu0 0
          %1403 = vmatmul.mubr.bf16.gmra.mrb[0].mxu0 %v1255
          %v1404 = vpop.f32.mrb[0].mxu0
          %v1405 = vadd.f32 %v1288, %v1404
          %v1406 = vpop.f32.mrb[0].mxu0
          %v1407 = vpop.f32.mrb[0].mxu0
          %v1408 = vadd.f32 %v1288, %v1407
          %v1409 = vpop.f32.mrb[0].mxu0
          %1410 = vmatprep.mubr.bf16.mxu0 0
          %1411 = vmatmul.mubr.bf16.gmra.mrb[0].mxu0 %v1256
          %v1412 = vpop.f32.mrb[0].mxu0
          %v1413 = vadd.f32 %v1288, %v1412
          %v1414 = vpop.f32.mrb[0].mxu0
          %v1415 = vpop.f32.mrb[0].mxu0
          %v1416 = vadd.f32 %v1288, %v1415
          %v1417 = vpop.f32.mrb[0].mxu0
          %1418 = vmatprep.mubr.bf16.mxu0 0
          %1419 = vmatmul.mubr.bf16.gmra.mrb[0].mxu0 %v1257
          %v1420 = vpop.f32.mrb[0].mxu0
          %v1421 = vadd.f32 %v1288, %v1420
          %v1422 = vpop.f32.mrb[0].mxu0
          %v1423 = vpop.f32.mrb[0].mxu0
          %v1424 = vadd.f32 %v1288, %v1423
          %v1425 = vpop.f32.mrb[0].mxu0
          %1426 = vmatprep.mubr.bf16.mxu0 0
          %1427 = vmatmul.mubr.bf16.gmra.mrb[0].mxu0 %v1258
          %v1428 = vpop.f32.mrb[0].mxu0
          %v1429 = vadd.f32 %v1288, %v1428
          %v1430 = vpop.f32.mrb[0].mxu0
          %v1431 = vpop.f32.mrb[0].mxu0
          %v1432 = vadd.f32 %v1288, %v1431
          %v1433 = vpop.f32.mrb[0].mxu0
          %1434 = vmatprep.mubr.bf16.mxu0 0
          %1435 = vmatmul.mubr.bf16.gmra.mrb[0].mxu0 %v1259
          %v1436 = vpop.f32.mrb[0].mxu0
          %v1437 = vadd.f32 %v1288, %v1436
          %v1438 = vpop.f32.mrb[0].mxu0
          %v1439 = vpop.f32.mrb[0].mxu0
          %v1440 = vadd.f32 %v1288, %v1439
          %v1441 = vpop.f32.mrb[0].mxu0
          %1442 = vmatprep.mubr.bf16.mxu0 0
          %1443 = vmatmul.mubr.bf16.gmra.mrb[0].mxu0 %v1260
          %v1444 = vpop.f32.mrb[0].mxu0
          %v1445 = vadd.f32 %v1288, %v1444
          %v1446 = vpop.f32.mrb[0].mxu0
          %v1447 = vpop.f32.mrb[0].mxu0
          %v1448 = vadd.f32 %v1288, %v1447
          %v1449 = vpop.f32.mrb[0].mxu0
          %1450 = vmatprep.mubr.bf16.mxu0 0
          %1451 = vmatmul.mubr.bf16.gmra.mrb[0].mxu0 %v1261
          %v1452 = vpop.f32.mrb[0].mxu0
          %v1453 = vadd.f32 %v1288, %v1452
          %v1454 = vpop.f32.mrb[0].mxu0
          %v1455 = vpop.f32.mrb[0].mxu0
          %v1456 = vadd.f32 %v1288, %v1455
          %v1457 = vpop.f32.mrb[0].mxu0
          %1458 = vmatprep.mubr.bf16.mxu0 0
          %1459 = vmatmul.mubr.bf16.gmra.mrb[0].mxu0 %v1262
          %v1460 = vpop.f32.mrb[0].mxu0
          %v1461 = vadd.f32 %v1288, %v1460
          %v1462 = vpop.f32.mrb[0].mxu0
          %v1463 = vpop.f32.mrb[0].mxu0
          %v1464 = vadd.f32 %v1288, %v1463
          %v1465 = vpop.f32.mrb[0].mxu0
          %1466 = vmatprep.mubr.bf16.mxu0 0
          %1467 = vmatmul.mubr.bf16.gmra.mrb[0].mxu0 %v1263
          %v1468 = vpop.f32.mrb[0].mxu0
          %v1469 = vadd.f32 %v1288, %v1468
          %v1470 = vpop.f32.mrb[0].mxu0
          %v1471 = vpop.f32.mrb[0].mxu0
          %v1472 = vadd.f32 %v1288, %v1471
          %v1473 = vpop.f32.mrb[0].mxu0
          %1474 = vmatprep.mubr.bf16.mxu0 0
          %1475 = vmatmul.mubr.bf16.gmra.mrb[0].mxu0 %v1264
          %v1476 = vpop.f32.mrb[0].mxu0
          %v1477 = vadd.f32 %v1288, %v1476
          %v1478 = vpop.f32.mrb[0].mxu0
          %v1479 = vpop.f32.mrb[0].mxu0
          %v1480 = vadd.f32 %v1288, %v1479
          %v1481 = vpop.f32.mrb[0].mxu0
          %1482 = vmatprep.mubr.bf16.mxu0 0
          %1483 = vmatmul.mubr.bf16.gmra.mrb[0].mxu0 %v1265
          %v1484 = vpop.f32.mrb[0].mxu0
          %v1485 = vadd.f32 %v1288, %v1484
          %v1486 = vpop.f32.mrb[0].mxu0
          %v1487 = vpop.f32.mrb[0].mxu0
          %v1488 = vadd.f32 %v1288, %v1487
          %v1489 = vpop.f32.mrb[0].mxu0
          %1490 = vmatprep.mubr.bf16.mxu0 0
          %1491 = vmatmul.mubr.bf16.gmra.mrb[0].mxu0 %v1266
          %v1492 = vpop.f32.mrb[0].mxu0
          %v1493 = vadd.f32 %v1288, %v1492
          %v1494 = vpop.f32.mrb[0].mxu0
          %v1495 = vpop.f32.mrb[0].mxu0
          %v1496 = vadd.f32 %v1288, %v1495
          %v1497 = vpop.f32.mrb[0].mxu0
          %1498 = vdwg.mxu0
          %v1499 = vmax.f32 %v1373, 0.0
          %v1500 = vmax.f32 %v1376, 0.0
          %v1501 = vmax.f32 %v1381, 0.0
          %v1502 = vmax.f32 %v1384, 0.0
          %v1503 = vmax.f32 %v1389, 0.0
          %v1504 = vmax.f32 %v1392, 0.0
          %v1505 = vmax.f32 %v1397, 0.0
          %v1506 = vmax.f32 %v1400, 0.0
          %v1507 = vmax.f32 %v1405, 0.0
          %v1508 = vmax.f32 %v1408, 0.0
          %v1509 = vmax.f32 %v1413, 0.0
          %v1510 = vmax.f32 %v1416, 0.0
          %v1511 = vmax.f32 %v1421, 0.0
          %v1512 = vmax.f32 %v1424, 0.0
          %v1513 = vmax.f32 %v1429, 0.0
          %v1514 = vmax.f32 %v1432, 0.0
          %v1515 = vmax.f32 %v1437, 0.0
          %v1516 = vmax.f32 %v1440, 0.0
          %v1517 = vmax.f32 %v1445, 0.0
          %v1518 = vmax.f32 %v1448, 0.0
          %v1519 = vmax.f32 %v1453, 0.0
          %v1520 = vmax.f32 %v1456, 0.0
          %v1521 = vmax.f32 %v1461, 0.0
          %v1522 = vmax.f32 %v1464, 0.0
          %v1523 = vmax.f32 %v1469, 0.0
          %v1524 = vmax.f32 %v1472, 0.0
          %v1525 = vmax.f32 %v1477, 0.0
          %v1526 = vmax.f32 %v1480, 0.0
          %v1527 = vmax.f32 %v1485, 0.0
          %v1528 = vmax.f32 %v1488, 0.0
          %v1529 = vmax.f32 %v1493, 0.0
          %v1530 = vmax.f32 %v1496, 0.0
          %v1531 = vpack.c.bf16 %v1500, %v1499
          %v1532 = vpack.c.bf16 %v1502, %v1501
          %v1533 = vpack.c.bf16 %v1504, %v1503
          %v1534 = vpack.c.bf16 %v1506, %v1505
          %v1535 = vpack.c.bf16 %v1508, %v1507
          %v1536 = vpack.c.bf16 %v1510, %v1509
          %v1537 = vpack.c.bf16 %v1512, %v1511
          %v1538 = vpack.c.bf16 %v1514, %v1513
          %v1539 = vpack.c.bf16 %v1516, %v1515
          %v1540 = vpack.c.bf16 %v1518, %v1517
          %v1541 = vpack.c.bf16 %v1520, %v1519
          %v1542 = vpack.c.bf16 %v1522, %v1521
          %v1543 = vpack.c.bf16 %v1524, %v1523
          %v1544 = vpack.c.bf16 %v1526, %v1525
          %v1545 = vpack.c.bf16 %v1528, %v1527
          %v1546 = vpack.c.bf16 %v1530, %v1529
          %v1547 = vld [vmem:[%s449] sm:$0xf]
          %v1548 = vld [vmem:[%s449 + $0x4] sm:$0xf]
          %v1549 = vld [vmem:[%s449 + $0x8] sm:$0xf]
          %v1550 = vld [vmem:[%s449 + $0xc] sm:$0xf]
          %v1551 = vld [vmem:[%s449 + $0x10] sm:$0xf]
          %v1552 = vld [vmem:[%s449 + $0x14] sm:$0xf]
          %v1553 = vld [vmem:[%s449 + $0x18] sm:$0xf]
          %v1554 = vld [vmem:[%s449 + $0x1c] sm:$0xf]
          %v1555 = vld [vmem:[%s449 + $0x20] sm:$0xf]
          %v1556 = vld [vmem:[%s449 + $0x24] sm:$0xf]
          %v1557 = vld [vmem:[%s449 + $0x28] sm:$0xf]
          %v1558 = vld [vmem:[%s449 + $0x2c] sm:$0xf]
          %v1559 = vld [vmem:[%s449 + $0x30] sm:$0xf]
          %v1560 = vld [vmem:[%s449 + $0x34] sm:$0xf]
          %v1561 = vld [vmem:[%s449 + $0x38] sm:$0xf]
          %v1562 = vld [vmem:[%s449 + $0x3c] sm:$0xf]
          %v1563 = vld [vmem:[%s517] sm:$0x1]
          %v1565 = vlaneseq
          %v1566 = vshrl.u32 %v1565, 7
          %v1567 = vsub.s32 0, %v1566
          %v1568 = vrot.slane %v1563, %v1567
          %v1586 = vunpack.c.l.b16 %v1547
          %v1587 = vunpack.c.l.b16 %v1548
          %v1588 = vunpack.c.l.b16 %v1549
          %v1589 = vunpack.c.l.b16 %v1550
          %v1590 = vunpack.c.l.b16 %v1551
          %v1591 = vunpack.c.l.b16 %v1552
          %v1592 = vunpack.c.l.b16 %v1553
          %v1593 = vunpack.c.l.b16 %v1554
          %v1594 = vunpack.c.l.b16 %v1555
          %v1595 = vunpack.c.l.b16 %v1556
          %v1596 = vunpack.c.l.b16 %v1557
          %v1597 = vunpack.c.l.b16 %v1558
          %v1598 = vunpack.c.l.b16 %v1559
          %v1599 = vunpack.c.l.b16 %v1560
          %v1600 = vunpack.c.l.b16 %v1561
          %v1601 = vunpack.c.l.b16 %v1562
          %v1602 = vpack.c.b16 %v1587, %v1586
          %v1603 = vpack.c.b16 %v1589, %v1588
          %v1604 = vpack.c.b16 %v1591, %v1590
          %v1605 = vpack.c.b16 %v1593, %v1592
          %v1606 = vpack.c.b16 %v1595, %v1594
          %v1607 = vpack.c.b16 %v1597, %v1596
          %v1608 = vpack.c.b16 %v1599, %v1598
          %v1609 = vpack.c.b16 %v1601, %v1600
          %1618 = vmatprep.subr.bf16.mxu0 0
          %1619 = vmatpush1.bf16.msra.mxu0 %v1602
          %1620 = vmatprep.subr.bf16.mxu0 0
          %1621 = vmatpush1.bf16.msra.mxu0 %v1603
          %1622 = vmatprep.subr.bf16.mxu0 0
          %1623 = vmatpush1.bf16.msra.mxu0 %v1604
          %1624 = vmatprep.subr.bf16.mxu0 0
          %1625 = vmatpush1.bf16.msra.mxu0 %v1605
          %1626 = vmatprep.subr.bf16.mxu0 0
          %1627 = vmatpush1.bf16.msra.mxu0 %v1606
          %1628 = vmatprep.subr.bf16.mxu0 0
          %1629 = vmatpush1.bf16.msra.mxu0 %v1607
          %1630 = vmatprep.subr.bf16.mxu0 0
          %1631 = vmatpush1.bf16.msra.mxu0 %v1608
          %1632 = vmatprep.subr.bf16.mxu0 0
          %1633 = vmatpush1.bf16.msra.mxu0 %v1609
          %1634 = vmatprep.subr.bf16.mxu0 0
          %1635 = vmatpush1.bf16.msra.mxu0 0
          %1636 = vmatprep.subr.bf16.mxu0 0
          %1637 = vmatpush1.bf16.msra.mxu0 0
          %1638 = vmatprep.subr.bf16.mxu0 0
          %1639 = vmatpush1.bf16.msra.mxu0 0
          %1640 = vmatprep.subr.bf16.mxu0 0
          %1641 = vmatpush1.bf16.msra.mxu0 0
          %1642 = vmatprep.subr.bf16.mxu0 0
          %1643 = vmatpush1.bf16.msra.mxu0 0
          %1644 = vmatprep.subr.bf16.mxu0 0
          %1645 = vmatpush1.bf16.msra.mxu0 0
          %1646 = vmatprep.subr.bf16.mxu0 0
          %1647 = vmatpush1.bf16.msra.mxu0 0
          %1648 = vmatprep.subr.bf16.mxu0 0
          %1649 = vmatpush1.bf16.msra.mxu0 0
          %1650 = vmatprep.mubr.bf16.mxu0 0
          %1651 = vmatmul.mubr.bf16.gmra.mrb[0].mxu0 %v1531
          %v1652 = vpop.f32.mrb[0].mxu0
          %v1653 = vadd.f32 %v1568, %v1652
          %v1654 = vpop.f32.mrb[0].mxu0
          %v1655 = vpop.f32.mrb[0].mxu0
          %v1656 = vadd.f32 %v1568, %v1655
          %v1657 = vpop.f32.mrb[0].mxu0
          %1658 = vmatprep.mubr.bf16.mxu0 0
          %1659 = vmatmul.mubr.bf16.gmra.mrb[0].mxu0 %v1532
          %v1660 = vpop.f32.mrb[0].mxu0
          %v1661 = vadd.f32 %v1568, %v1660
          %v1662 = vpop.f32.mrb[0].mxu0
          %v1663 = vpop.f32.mrb[0].mxu0
          %v1664 = vadd.f32 %v1568, %v1663
          %v1665 = vpop.f32.mrb[0].mxu0
          %1666 = vmatprep.mubr.bf16.mxu0 0
          %1667 = vmatmul.mubr.bf16.gmra.mrb[0].mxu0 %v1533
          %v1668 = vpop.f32.mrb[0].mxu0
          %v1669 = vadd.f32 %v1568, %v1668
          %v1670 = vpop.f32.mrb[0].mxu0
          %v1671 = vpop.f32.mrb[0].mxu0
          %v1672 = vadd.f32 %v1568, %v1671
          %v1673 = vpop.f32.mrb[0].mxu0
          %1674 = vmatprep.mubr.bf16.mxu0 0
          %1675 = vmatmul.mubr.bf16.gmra.mrb[0].mxu0 %v1534
          %v1676 = vpop.f32.mrb[0].mxu0
          %v1677 = vadd.f32 %v1568, %v1676
          %v1678 = vpop.f32.mrb[0].mxu0
          %v1679 = vpop.f32.mrb[0].mxu0
          %v1680 = vadd.f32 %v1568, %v1679
          %v1681 = vpop.f32.mrb[0].mxu0
          %1682 = vmatprep.mubr.bf16.mxu0 0
          %1683 = vmatmul.mubr.bf16.gmra.mrb[0].mxu0 %v1535
          %v1684 = vpop.f32.mrb[0].mxu0
          %v1685 = vadd.f32 %v1568, %v1684
          %v1686 = vpop.f32.mrb[0].mxu0
          %v1687 = vpop.f32.mrb[0].mxu0
          %v1688 = vadd.f32 %v1568, %v1687
          %v1689 = vpop.f32.mrb[0].mxu0
          %1690 = vmatprep.mubr.bf16.mxu0 0
          %1691 = vmatmul.mubr.bf16.gmra.mrb[0].mxu0 %v1536
          %v1692 = vpop.f32.mrb[0].mxu0
          %v1693 = vadd.f32 %v1568, %v1692
          %v1694 = vpop.f32.mrb[0].mxu0
          %v1695 = vpop.f32.mrb[0].mxu0
          %v1696 = vadd.f32 %v1568, %v1695
          %v1697 = vpop.f32.mrb[0].mxu0
          %1698 = vmatprep.mubr.bf16.mxu0 0
          %1699 = vmatmul.mubr.bf16.gmra.mrb[0].mxu0 %v1537
          %v1700 = vpop.f32.mrb[0].mxu0
          %v1701 = vadd.f32 %v1568, %v1700
          %v1702 = vpop.f32.mrb[0].mxu0
          %v1703 = vpop.f32.mrb[0].mxu0
          %v1704 = vadd.f32 %v1568, %v1703
          %v1705 = vpop.f32.mrb[0].mxu0
          %1706 = vmatprep.mubr.bf16.mxu0 0
          %1707 = vmatmul.mubr.bf16.gmra.mrb[0].mxu0 %v1538
          %v1708 = vpop.f32.mrb[0].mxu0
          %v1709 = vadd.f32 %v1568, %v1708
          %v1710 = vpop.f32.mrb[0].mxu0
          %v1711 = vpop.f32.mrb[0].mxu0
          %v1712 = vadd.f32 %v1568, %v1711
          %v1713 = vpop.f32.mrb[0].mxu0
          %1714 = vmatprep.mubr.bf16.mxu0 0
          %1715 = vmatmul.mubr.bf16.gmra.mrb[0].mxu0 %v1539
          %v1716 = vpop.f32.mrb[0].mxu0
          %v1717 = vadd.f32 %v1568, %v1716
          %v1718 = vpop.f32.mrb[0].mxu0
          %v1719 = vpop.f32.mrb[0].mxu0
          %v1720 = vadd.f32 %v1568, %v1719
          %v1721 = vpop.f32.mrb[0].mxu0
          %1722 = vmatprep.mubr.bf16.mxu0 0
          %1723 = vmatmul.mubr.bf16.gmra.mrb[0].mxu0 %v1540
          %v1724 = vpop.f32.mrb[0].mxu0
          %v1725 = vadd.f32 %v1568, %v1724
          %v1726 = vpop.f32.mrb[0].mxu0
          %v1727 = vpop.f32.mrb[0].mxu0
          %v1728 = vadd.f32 %v1568, %v1727
          %v1729 = vpop.f32.mrb[0].mxu0
          %1730 = vmatprep.mubr.bf16.mxu0 0
          %1731 = vmatmul.mubr.bf16.gmra.mrb[0].mxu0 %v1541
          %v1732 = vpop.f32.mrb[0].mxu0
          %v1733 = vadd.f32 %v1568, %v1732
          %v1734 = vpop.f32.mrb[0].mxu0
          %v1735 = vpop.f32.mrb[0].mxu0
          %v1736 = vadd.f32 %v1568, %v1735
          %v1737 = vpop.f32.mrb[0].mxu0
          %1738 = vmatprep.mubr.bf16.mxu0 0
          %1739 = vmatmul.mubr.bf16.gmra.mrb[0].mxu0 %v1542
          %v1740 = vpop.f32.mrb[0].mxu0
          %v1741 = vadd.f32 %v1568, %v1740
          %v1742 = vpop.f32.mrb[0].mxu0
          %v1743 = vpop.f32.mrb[0].mxu0
          %v1744 = vadd.f32 %v1568, %v1743
          %v1745 = vpop.f32.mrb[0].mxu0
          %1746 = vmatprep.mubr.bf16.mxu0 0
          %1747 = vmatmul.mubr.bf16.gmra.mrb[0].mxu0 %v1543
          %v1748 = vpop.f32.mrb[0].mxu0
          %v1749 = vadd.f32 %v1568, %v1748
          %v1750 = vpop.f32.mrb[0].mxu0
          %v1751 = vpop.f32.mrb[0].mxu0
          %v1752 = vadd.f32 %v1568, %v1751
          %v1753 = vpop.f32.mrb[0].mxu0
          %1754 = vmatprep.mubr.bf16.mxu0 0
          %1755 = vmatmul.mubr.bf16.gmra.mrb[0].mxu0 %v1544
          %v1756 = vpop.f32.mrb[0].mxu0
          %v1757 = vadd.f32 %v1568, %v1756
          %v1758 = vpop.f32.mrb[0].mxu0
          %v1759 = vpop.f32.mrb[0].mxu0
          %v1760 = vadd.f32 %v1568, %v1759
          %v1761 = vpop.f32.mrb[0].mxu0
          %1762 = vmatprep.mubr.bf16.mxu0 0
          %1763 = vmatmul.mubr.bf16.gmra.mrb[0].mxu0 %v1545
          %v1764 = vpop.f32.mrb[0].mxu0
          %v1765 = vadd.f32 %v1568, %v1764
          %v1766 = vpop.f32.mrb[0].mxu0
          %v1767 = vpop.f32.mrb[0].mxu0
          %v1768 = vadd.f32 %v1568, %v1767
          %v1769 = vpop.f32.mrb[0].mxu0
          %1770 = vmatprep.mubr.bf16.mxu0 0
          %1771 = vmatmul.mubr.bf16.gmra.mrb[0].mxu0 %v1546
          %v1772 = vpop.f32.mrb[0].mxu0
          %v1773 = vadd.f32 %v1568, %v1772
          %v1774 = vpop.f32.mrb[0].mxu0
          %v1775 = vpop.f32.mrb[0].mxu0
          %v1776 = vadd.f32 %v1568, %v1775
          %v1777 = vpop.f32.mrb[0].mxu0
          %1778 = vdwg.mxu0
          %v1779 = vmax.f32 %v1653, 0.0
          %v1780 = vmax.f32 %v1656, 0.0
          %v1781 = vmax.f32 %v1661, 0.0
          %v1782 = vmax.f32 %v1664, 0.0
          %v1783 = vmax.f32 %v1669, 0.0
          %v1784 = vmax.f32 %v1672, 0.0
          %v1785 = vmax.f32 %v1677, 0.0
          %v1786 = vmax.f32 %v1680, 0.0
          %v1787 = vmax.f32 %v1685, 0.0
          %v1788 = vmax.f32 %v1688, 0.0
          %v1789 = vmax.f32 %v1693, 0.0
          %v1790 = vmax.f32 %v1696, 0.0
          %v1791 = vmax.f32 %v1701, 0.0
          %v1792 = vmax.f32 %v1704, 0.0
          %v1793 = vmax.f32 %v1709, 0.0
          %v1794 = vmax.f32 %v1712, 0.0
          %v1795 = vmax.f32 %v1717, 0.0
          %v1796 = vmax.f32 %v1720, 0.0
          %v1797 = vmax.f32 %v1725, 0.0
          %v1798 = vmax.f32 %v1728, 0.0
          %v1799 = vmax.f32 %v1733, 0.0
          %v1800 = vmax.f32 %v1736, 0.0
          %v1801 = vmax.f32 %v1741, 0.0
          %v1802 = vmax.f32 %v1744, 0.0
          %v1803 = vmax.f32 %v1749, 0.0
          %v1804 = vmax.f32 %v1752, 0.0
          %v1805 = vmax.f32 %v1757, 0.0
          %v1806 = vmax.f32 %v1760, 0.0
          %v1807 = vmax.f32 %v1765, 0.0
          %v1808 = vmax.f32 %v1768, 0.0
          %v1809 = vmax.f32 %v1773, 0.0
          %v1810 = vmax.f32 %v1776, 0.0
          %v1811 = vld [vmem:[%s520] sm:$0x1]
          %v1813 = vlaneseq
          %v1814 = vshrl.u32 %v1813, 7
          %v1815 = vsub.s32 0, %v1814
          %v1816 = vrot.slane %v1811, %v1815
          %v1818 = vmul.f32 %v1779, %v1816
          %v1819 = vmul.f32 %v1780, %v1816
          %v1820 = vmul.f32 %v1781, %v1816
          %v1821 = vmul.f32 %v1782, %v1816
          %v1822 = vmul.f32 %v1783, %v1816
          %v1823 = vmul.f32 %v1784, %v1816
          %v1824 = vmul.f32 %v1785, %v1816
          %v1825 = vmul.f32 %v1786, %v1816
          %v1826 = vmul.f32 %v1787, %v1816
          %v1827 = vmul.f32 %v1788, %v1816
          %v1828 = vmul.f32 %v1789, %v1816
          %v1829 = vmul.f32 %v1790, %v1816
          %v1830 = vmul.f32 %v1791, %v1816
          %v1831 = vmul.f32 %v1792, %v1816
          %v1832 = vmul.f32 %v1793, %v1816
          %v1833 = vmul.f32 %v1794, %v1816
          %v1834 = vmul.f32 %v1795, %v1816
          %v1835 = vmul.f32 %v1796, %v1816
          %v1836 = vmul.f32 %v1797, %v1816
          %v1837 = vmul.f32 %v1798, %v1816
          %v1838 = vmul.f32 %v1799, %v1816
          %v1839 = vmul.f32 %v1800, %v1816
          %v1840 = vmul.f32 %v1801, %v1816
          %v1841 = vmul.f32 %v1802, %v1816
          %v1842 = vmul.f32 %v1803, %v1816
          %v1843 = vmul.f32 %v1804, %v1816
          %v1844 = vmul.f32 %v1805, %v1816
          %v1845 = vmul.f32 %v1806, %v1816
          %v1846 = vmul.f32 %v1807, %v1816
          %v1847 = vmul.f32 %v1808, %v1816
          %v1848 = vmul.f32 %v1809, %v1816
          %v1849 = vmul.f32 %v1810, %v1816
          %v1850 = vld [vmem:[%s523] sm:$0x1]
          %v1852 = vlaneseq
          %v1853 = vshrl.u32 %v1852, 7
          %v1854 = vsub.s32 0, %v1853
          %v1855 = vrot.slane %v1850, %v1854
          %v1857 = vadd.f32 %v1818, %v1855
          %v1858 = vadd.f32 %v1819, %v1855
          %v1859 = vadd.f32 %v1820, %v1855
          %v1860 = vadd.f32 %v1821, %v1855
          %v1861 = vadd.f32 %v1822, %v1855
          %v1862 = vadd.f32 %v1823, %v1855
          %v1863 = vadd.f32 %v1824, %v1855
          %v1864 = vadd.f32 %v1825, %v1855
          %v1865 = vadd.f32 %v1826, %v1855
          %v1866 = vadd.f32 %v1827, %v1855
          %v1867 = vadd.f32 %v1828, %v1855
          %v1868 = vadd.f32 %v1829, %v1855
          %v1869 = vadd.f32 %v1830, %v1855
          %v1870 = vadd.f32 %v1831, %v1855
          %v1871 = vadd.f32 %v1832, %v1855
          %v1872 = vadd.f32 %v1833, %v1855
          %v1873 = vadd.f32 %v1834, %v1855
          %v1874 = vadd.f32 %v1835, %v1855
          %v1875 = vadd.f32 %v1836, %v1855
          %v1876 = vadd.f32 %v1837, %v1855
          %v1877 = vadd.f32 %v1838, %v1855
          %v1878 = vadd.f32 %v1839, %v1855
          %v1879 = vadd.f32 %v1840, %v1855
          %v1880 = vadd.f32 %v1841, %v1855
          %v1881 = vadd.f32 %v1842, %v1855
          %v1882 = vadd.f32 %v1843, %v1855
          %v1883 = vadd.f32 %v1844, %v1855
          %v1884 = vadd.f32 %v1845, %v1855
          %v1885 = vadd.f32 %v1846, %v1855
          %v1886 = vadd.f32 %v1847, %v1855
          %v1887 = vadd.f32 %v1848, %v1855
          %v1888 = vadd.f32 %v1849, %v1855
          %v1889 = vpack.c.bf16 %v1858, %v1857
          %v1890 = vpack.c.bf16 %v1860, %v1859
          %v1891 = vpack.c.bf16 %v1862, %v1861
          %v1892 = vpack.c.bf16 %v1864, %v1863
          %v1893 = vpack.c.bf16 %v1866, %v1865
          %v1894 = vpack.c.bf16 %v1868, %v1867
          %v1895 = vpack.c.bf16 %v1870, %v1869
          %v1896 = vpack.c.bf16 %v1872, %v1871
          %v1897 = vpack.c.bf16 %v1874, %v1873
          %v1898 = vpack.c.bf16 %v1876, %v1875
          %v1899 = vpack.c.bf16 %v1878, %v1877
          %v1900 = vpack.c.bf16 %v1880, %v1879
          %v1901 = vpack.c.bf16 %v1882, %v1881
          %v1902 = vpack.c.bf16 %v1884, %v1883
          %v1903 = vpack.c.bf16 %v1886, %v1885
          %v1904 = vpack.c.bf16 %v1888, %v1887
          %s1905 = smul.u32 %s37, 256
          %s1906 = sadd.s32 %s552, %s1905
          %s1907 = sshra.s32 %s1906, 4
          %s1908 = sand.u32 %s1906, 15
          %s1909 = smul.addr %s1907, 8
          %s1910 = scalar_lea.vmem [#allocation3], %s1909
          %1911 = vst [vmem:[%s1910] sm:$0xff] %v1889
          %1912 = vst [vmem:[%s1910 + $0x8] sm:$0xff] %v1890
          %1913 = vst [vmem:[%s1910 + $0x10] sm:$0xff] %v1891
          %1914 = vst [vmem:[%s1910 + $0x18] sm:$0xff] %v1892
          %1915 = vst [vmem:[%s1910 + $0x20] sm:$0xff] %v1893
          %1916 = vst [vmem:[%s1910 + $0x28] sm:$0xff] %v1894
          %1917 = vst [vmem:[%s1910 + $0x30] sm:$0xff] %v1895
          %1918 = vst [vmem:[%s1910 + $0x38] sm:$0xff] %v1896
          %1919 = vst [vmem:[%s1910 + $0x40] sm:$0xff] %v1897
          %1920 = vst [vmem:[%s1910 + $0x48] sm:$0xff] %v1898
          %1921 = vst [vmem:[%s1910 + $0x50] sm:$0xff] %v1899
          %1922 = vst [vmem:[%s1910 + $0x58] sm:$0xff] %v1900
          %1923 = vst [vmem:[%s1910 + $0x60] sm:$0xff] %v1901
          %1924 = vst [vmem:[%s1910 + $0x68] sm:$0xff] %v1902
          %1925 = vst [vmem:[%s1910 + $0x70] sm:$0xff] %v1903
          %1926 = vst [vmem:[%s1910 + $0x78] sm:$0xff] %v1904
          %1927 = vst [vmem:[%s508] sm:$0xff] %v1857
          %1928 = vst [vmem:[%s508 + $0x8] sm:$0xff] %v1858
          %1929 = vst [vmem:[%s508 + $0x10] sm:$0xff] %v1859
          %1930 = vst [vmem:[%s508 + $0x18] sm:$0xff] %v1860
          %1931 = vst [vmem:[%s508 + $0x20] sm:$0xff] %v1861
          %1932 = vst [vmem:[%s508 + $0x28] sm:$0xff] %v1862
          %1933 = vst [vmem:[%s508 + $0x30] sm:$0xff] %v1863
          %1934 = vst [vmem:[%s508 + $0x38] sm:$0xff] %v1864
          %1935 = vst [vmem:[%s508 + $0x40] sm:$0xff] %v1865
          %1936 = vst [vmem:[%s508 + $0x48] sm:$0xff] %v1866
          %1937 = vst [vmem:[%s508 + $0x50] sm:$0xff] %v1867
          %1938 = vst [vmem:[%s508 + $0x58] sm:$0xff] %v1868
          %1939 = vst [vmem:[%s508 + $0x60] sm:$0xff] %v1869
          %1940 = vst [vmem:[%s508 + $0x68] sm:$0xff] %v1870
          %1941 = vst [vmem:[%s508 + $0x70] sm:$0xff] %v1871
          %1942 = vst [vmem:[%s508 + $0x78] sm:$0xff] %v1872
          %1943 = vst [vmem:[%s508 + $0x80] sm:$0xff] %v1873
          %1944 = vst [vmem:[%s508 + $0x88] sm:$0xff] %v1874
          %1945 = vst [vmem:[%s508 + $0x90] sm:$0xff] %v1875
          %1946 = vst [vmem:[%s508 + $0x98] sm:$0xff] %v1876
          %1947 = vst [vmem:[%s508 + $0xa0] sm:$0xff] %v1877
          %1948 = vst [vmem:[%s508 + $0xa8] sm:$0xff] %v1878
          %1949 = vst [vmem:[%s508 + $0xb0] sm:$0xff] %v1879
          %1950 = vst [vmem:[%s508 + $0xb8] sm:$0xff] %v1880
          %1951 = vst [vmem:[%s508 + $0xc0] sm:$0xff] %v1881
          %1952 = vst [vmem:[%s508 + $0xc8] sm:$0xff] %v1882
          %1953 = vst [vmem:[%s508 + $0xd0] sm:$0xff] %v1883
          %1954 = vst [vmem:[%s508 + $0xd8] sm:$0xff] %v1884
          %1955 = vst [vmem:[%s508 + $0xe0] sm:$0xff] %v1885
          %1956 = vst [vmem:[%s508 + $0xe8] sm:$0xff] %v1886
          %1957 = vst [vmem:[%s508 + $0xf0] sm:$0xff] %v1887
          %1958 = vst [vmem:[%s508 + $0xf8] sm:$0xff] %v1888
        $region80: #{tpu_custom_call.1} parent=51 // pred_fallthru
          _
        %s1959 = sand.u32 %s268, 1
        %s1960 = scalar_lea.sflag [#allocation6], %s1959
        %s1961 = sand.u32 %s268, 1
        %s1962 = smul.addr %s1961, 256
        %s1963 = scalar_lea.vmem [#allocation12], %s1962
        // Predicated region
        $region81: #{tpu_custom_call.1} parent=51 // pred_check
          %p1964 = pneg %p278
        $region82: #{tpu_custom_call.1} parent=51 // pred_check_branch
          %1966 = sbr.rel (%p1964) target = $region84
        $region83: #{tpu_custom_call.1} parent=51 // pred_region
          %s1967 = smul.u32 32, %s37
          %s1969 = ssub.s32 4096, 4096
          %1970 = vsyncadd %s1960, %s1969
          %s1971 = smul.addr %s1967, 128
          %s1972 = scalar_lea.hbm %s8, %s1971
          %s1973 = sshll.u32 %s1963, 4
          %s1974 = int_to_ptr.vmem [resolvable:$true] %s1973
          %1979 = dma.vmem_to_hbm [thread:$0]  %s1974, 4096, %s1972, %s1960, 128, 128, 8
        $region84: #{tpu_custom_call.1} parent=51 // pred_fallthru
          _
      $region52: #{tpu_custom_call.1} parent=5 // pred_fallthru
        _
      %p1980 = scmp.le.s32.totalorder 2, %s26
      // Predicated region
      $region85: #{tpu_custom_call.1} parent=5 // pred_check
        %p1981 = pneg %p1980
      $region86: #{tpu_custom_call.1} parent=5 // pred_check_branch
        %1983 = sbr.rel (%p1981) target = $region88
      $region87: #{tpu_custom_call.1} parent=5 // pred_region
        %s1984 = ssub.s32 %s26, 2
        // Predicated region
        $region89: #{tpu_custom_call.1} parent=87 // pred_check
          %p1985 = pneg %p284
        $region90: #{tpu_custom_call.1} parent=87 // pred_check_branch
          %1987 = sbr.rel (%p1985) target = $region92
        $region91: #{tpu_custom_call.1} parent=87 // pred_region
          %s1988 = sand.u32 %s269, 1
          %s1989 = scalar_lea.sflag [#allocation6], %s1988
          %s1990 = sand.u32 %s269, 1
          %s1991 = smul.addr %s1990, 256
          %s1992 = scalar_lea.vmem [#allocation12], %s1991
          %1993 = dma.done %s1989, 4096
        $region92: #{tpu_custom_call.1} parent=87 // pred_fallthru
          _
      $region88: #{tpu_custom_call.1} parent=5 // pred_fallthru
        _
    $region6: #{tpu_custom_call.1} parent=1 // loop_footer
      %s30 = sadd.s32 1, %s26
    $region7: #{tpu_custom_call.1} parent=1 // loop_footer_branch
      %25 = sbr.rel target = $region3
    $region8: #{tpu_custom_call.1} parent=1 // loop_exit
      _
    %1994 = vsyncpa [#allocation5], 1
    %s1995 = scalar_lea.sflag [#allocation5], 1
    %1996 = vsyncpa %s1995, 1
    %1997 = vsyncpa [#allocation8], 1
    %s1998 = scalar_lea.sflag [#allocation8], 1
    %1999 = vsyncpa %s1998, 1
    %2000 = vsyncpa [#allocation11], 1
    %s2001 = scalar_lea.sflag [#allocation11], 1
    %2002 = vsyncpa %s2001, 1
    %2003 = vsyncpa [#allocation6], 1
    %s2004 = scalar_lea.sflag [#allocation6], 1
    %2005 = vsyncpa %s2004, 1

</llo_original>
